<compile_context>
chip_gen: v6e
topology: v6e:2x2x1
jax: 0.10.0
libtpu: 0.0.40
codegen_flags: <defaults>
</compile_context>

<pallas_src>
import jax
import jax.numpy as jnp
import numpy as np
from jax.experimental import pallas as pl
from jax.experimental.pallas import tpu as pltpu

K = 3        # kernel size
STRIDE = 2   # transposed-conv stride (upsampling factor)

# (output parity along an axis, tap offset in {0,1}) -> original kernel index.
# Derived from:  out[2j]   = w[0]*x[j-1] + w[2]*x[j]
#                out[2j+1] = w[1]*x[j]
_AXIS_TAP_TO_K = {(0, 0): 0, (0, 1): 2, (1, 1): 1}


def _upsample_cells_kernel(x_ref, xh_ref, w_ref, o_ref):
    """One grid step = (batch n, depth-cell tile j): Td depth cells, all 8 parities.

    x_ref  : (1, Td, H+2, W+2, Cin)            planes j*Td .. j*Td+Td-1 (bf16)
    xh_ref : (1, 1,  H+2, W+2, Cin)            halo plane j*Td+Td (bf16)
    w_ref  : (8*Cin, 8*Cout_pad)               fused (tap,cin) x (class,cout) weights (bf16)
    o_ref  : (1, 1, Td*(H+1)*(W+1), 8*Cout_pad) bf16 output cells
    """
    _, td, hp, wp, cin = x_ref.shape
    hc, wc = hp - 1, wp - 1          # output cells per in-plane axis

    # Value-level im2col: 8 whole-plane window slices per depth cell, concatenated
    # along the channel axis (tap-major / cin-minor -> matches fused weight rows).
    cells = []
    for jd in range(td):
        taps = []
        for od in range(2):
            d = jd + od
            for oh in range(2):
                for ow in range(2):
                    if d < td:
                        win = x_ref[0, d, oh:oh + hc, ow:ow + wc, :]
                    else:
                        win = xh_ref[0, 0, oh:oh + hc, ow:ow + wc, :]
                    taps.append(win)                              # (hc, wc, cin) bf16
        cell = jnp.concatenate(taps, axis=-1)                     # (hc, wc, 8*cin)
        cells.append(cell.reshape(hc * wc, 8 * cin))              # lane dim unchanged
    patch = cells[0] if td == 1 else jnp.concatenate(cells, axis=0)   # (Td*m, 8*cin)

    # Single fused MXU matmul: all 8 parity classes for all Td*m cells at once.
    acc = jnp.dot(patch, w_ref[...], preferred_element_type=jnp.float32)
    o_ref[0, 0] = acc.astype(o_ref.dtype)                         # one lane-dense slab store


def _fuse_weights(w):
    """(27, Cin, Cout) torchsparse layout -> (8*Cin, 8*Cout) fused parity matrix."""
    cin, cout = w.shape[1], w.shape[2]
    idx = np.zeros((8, 8), np.int32)
    msk = np.zeros((8, 8), np.float32)
    for pd in range(2):
        for ph in range(2):
            for pw in range(2):
                ci = pd * 4 + ph * 2 + pw            # output parity class
                for od in range(2):
                    for oh in range(2):
                        for ow in range(2):
                            kd = _AXIS_TAP_TO_K.get((pd, od))
                            kh = _AXIS_TAP_TO_K.get((ph, oh))
                            kw = _AXIS_TAP_TO_K.get((pw, ow))
                            if kd is None or kh is None or kw is None:
                                continue             # structurally-zero dilated tap
                            t = od * 4 + oh * 2 + ow
                            idx[t, ci] = kd * K * K + kh * K + kw
                            msk[t, ci] = 1.0
    wf = w[idx] * msk[:, :, None, None]              # (tap, class, Cin, Cout)
    wf = jnp.transpose(wf, (0, 2, 1, 3))             # (tap, Cin, class, Cout)
    return wf.reshape(8 * cin, 8 * cout)


@jax.jit
def upsample_forward(x, w):
    """x: (N, D, H, W, Cin) f32, w: (27, Cin, Cout) f32 -> (N, 2D+1, 2H+1, 2W+1, Cout) f32."""
    N, D, H, W, cin = x.shape
    cout = w.shape[-1]
    OD = (D - 1) * STRIDE + K
    OH = (H - 1) * STRIDE + K
    OW = (W - 1) * STRIDE + K
    dc, hc, wc = D + 1, H + 1, W + 1                 # output "cells" per axis
    m = hc * wc

    # --- tiling choices (all static Python ints) -------------------------
    # Pad cout so the output lane dim 8*cout_pad is a multiple of 128 (lane-dense store).
    cout_pad = -(-cout // 16) * 16
    # Depth-cell tile Td: aim for MXU M ~ 256 rows, capped by a ~2 MiB input block and dc.
    plane_bytes = (H + 2) * (W + 2) * cin * 2        # one bf16 halo-padded plane
    td = max(1, min(dc, -(-256 // m), max(1, (2 << 20) // plane_bytes)))
    num_j = -(-dc // td)
    dc_pad = num_j * td                              # depth cells incl. zero padding

    # --- glue (plain JAX): halo pad + bf16 cast + fused weights ----------
    xpad = jnp.pad(
        x, ((0, 0), (1, 1 + (dc_pad - dc)), (1, 1), (1, 1), (0, 0))
    ).astype(jnp.bfloat16)                           # (N, dc_pad+1, H+2, W+2, cin)
    w_p = jnp.pad(w, ((0, 0), (0, 0), (0, cout_pad - cout)))
    wf = _fuse_weights(w_p).astype(jnp.bfloat16)     # (8*cin, 8*cout_pad)

    # --- VMEM budget derived from block sizes (safe for v7x's 64 MiB) ----
    in_b = (td + 1) * plane_bytes
    w_b = 8 * cin * 8 * cout_pad * 2
    out_b = td * m * 8 * cout_pad * 2
    patch_b = td * m * 8 * cin * 2 + td * m * 8 * cout_pad * 4
    vmem_limit = int(min(48 << 20,
                         max(16 << 20, 2 * (2 * (in_b + w_b + out_b) + patch_b))))

    out_cells = pl.pallas_call(
        _upsample_cells_kernel,
        out_shape=jax.ShapeDtypeStruct((N, num_j, td * m, 8 * cout_pad), jnp.bfloat16),
        grid=(N, num_j),
        in_specs=[
            # Td planes per step; only the single halo plane is re-fetched by the
            # next tile -> input HBM traffic ~ (Td+1)/Td x.
            pl.BlockSpec((1, td, H + 2, W + 2, cin), lambda n, j: (n, j, 0, 0, 0)),
            pl.BlockSpec((1, 1, H + 2, W + 2, cin),
                         lambda n, j: (n, j * td + td, 0, 0, 0)),
            # fused weights stay resident in VMEM (constant index map)
            pl.BlockSpec((8 * cin, 8 * cout_pad), lambda n, j: (0, 0)),
        ],
        out_specs=pl.BlockSpec((1, 1, td * m, 8 * cout_pad), lambda n, j: (n, j, 0, 0)),
        compiler_params=pltpu.CompilerParams(
            dimension_semantics=("parallel", "parallel"),
            vmem_limit_bytes=vmem_limit),
    )(xpad, xpad, wf)

    # --- glue (plain JAX, bf16): interleave the 8 parity classes ---------
    oc = out_cells.reshape(N, dc_pad, hc, wc, 2, 2, 2, cout_pad)   # (n,jd,jh,jw,pd,ph,pw,c)
    oc = jnp.transpose(oc, (0, 1, 4, 2, 5, 3, 6, 7))               # (n,jd,pd,jh,ph,jw,pw,c)
    full = oc.reshape(N, 2 * dc_pad, 2 * hc, 2 * wc, cout_pad)
    return full[:, :OD, :OH, :OW, :cout].astype(jnp.float32)


def _reference_dense_convT(x, w):
    """NumPy float64 reference of the same dense transposed conv."""
    x = np.asarray(x, np.float64)
    w = np.asarray(w, np.float64)
    N, D, H, W, Cin = x.shape
    Cout = w.shape[-1]
    wk = w.reshape(K, K, K, Cin, Cout)
    OD = (D - 1) * STRIDE + K
    OH = (H - 1) * STRIDE + K
    OW = (W - 1) * STRIDE + K
    xd = np.zeros((N, (D - 1) * STRIDE + 1, (H - 1) * STRIDE + 1,
                   (W - 1) * STRIDE + 1, Cin), np.float64)
    xd[:, ::STRIDE, ::STRIDE, ::STRIDE, :] = x
    pad = K - 1
    xp = np.pad(xd, ((0, 0), (pad, pad), (pad, pad), (pad, pad), (0, 0)))
    out = np.zeros((N, OD, OH, OW, Cout), np.float64)
    for kd in range(K):
        for kh in range(K):
            for kw in range(K):
                out += np.einsum(
                    "ndhwc,co->ndhwo",
                    xp[:, kd:kd + OD, kh:kh + OH, kw:kw + OW, :],
                    wk[kd, kh, kw])
    return out


if __name__ == "__main__":
    key = jax.random.PRNGKey(0)
    k_x, k_w = jax.random.split(key, 2)

    # small shapes: batch=2, channels=8->8, 4^3 voxel grid -> 9^3 output
    N, D, H, W = 2, 4, 4, 4
    C_IN, C_OUT = 8, 8

    x = jax.random.normal(k_x, (N, D, H, W, C_IN), jnp.float32)
    # spnn.Conv3d weight layout: (kernel_volume, in_channels, out_channels); bias=False.
    w = 0.1 * jax.random.normal(k_w, (K * K * K, C_IN, C_OUT), jnp.float32)

    out = upsample_forward(x, w)
    jax.block_until_ready(out)

    ref = _reference_dense_convT(x, w)
    assert out.shape == ref.shape, (out.shape, ref.shape)
    # Tolerance accounts for bf16 activations/weights/output (f32 MXU accumulation).
    np.testing.assert_allclose(np.asarray(out), ref, rtol=5e-2, atol=5e-2)

    print("KERNEL_OK")
</pallas_src>

<mosaic_0001>
module attributes {stable_mosaic.version = 11 : i64} {
  func.func @_upsample_cells_kernel(%arg0: i32, %arg1: i32, %arg2: memref<1x5x6x6x8xbf16, #tpu.memory_space<vmem>>, %arg3: memref<1x1x6x6x8xbf16, #tpu.memory_space<vmem>>, %arg4: memref<64x128xbf16, #tpu.memory_space<vmem>>, %arg5: memref<1x1x125x128xbf16, #tpu.memory_space<vmem>>) attributes {dimension_semantics = [#tpu.dimension_semantics<parallel>, #tpu.dimension_semantics<parallel>], iteration_bounds = array<i64: 2, 1>, scalar_prefetch = 0 : i64, scratch_operands = 0 : i64, tpu.core_type = #tpu.core_type<tc>, window_params = [{transform_indices = @transform_0, window_bounds = array<i64: 1, 5, 6, 6, 8>}, {transform_indices = @transform_1, window_bounds = array<i64: 1, 1, 6, 6, 8>}, {pipeline_mode = #tpu.pipeline_mode<synchronous>, transform_indices = @transform_2, window_bounds = array<i64: 64, 128>}, {transform_indices = @transform_3, window_bounds = array<i64: 1, 1, 125, 128>}]} {
    %c0 = arith.constant 0 : index
    %c0_0 = arith.constant 0 : index
    %c0_1 = arith.constant 0 : index
    %c0_2 = arith.constant 0 : index
    %c0_3 = arith.constant 0 : index
    %0 = vector.load %arg2[%c0, %c0_0, %c0_1, %c0_2, %c0_3] : memref<1x5x6x6x8xbf16, #tpu.memory_space<vmem>>, vector<1x1x5x5x8xbf16>
    %1 = vector.shape_cast %0 : vector<1x1x5x5x8xbf16> to vector<5x5x8xbf16>
    %c0_4 = arith.constant 0 : index
    %c0_5 = arith.constant 0 : index
    %c0_6 = arith.constant 0 : index
    %c1 = arith.constant 1 : index
    %c0_7 = arith.constant 0 : index
    %2 = vector.load %arg2[%c0_4, %c0_5, %c0_6, %c1, %c0_7] : memref<1x5x6x6x8xbf16, #tpu.memory_space<vmem>>, vector<1x1x5x5x8xbf16>
    %3 = vector.shape_cast %2 : vector<1x1x5x5x8xbf16> to vector<5x5x8xbf16>
    %c0_8 = arith.constant 0 : index
    %c0_9 = arith.constant 0 : index
    %c1_10 = arith.constant 1 : index
    %c0_11 = arith.constant 0 : index
    %c0_12 = arith.constant 0 : index
    %4 = vector.load %arg2[%c0_8, %c0_9, %c1_10, %c0_11, %c0_12] : memref<1x5x6x6x8xbf16, #tpu.memory_space<vmem>>, vector<1x1x5x5x8xbf16>
    %5 = vector.shape_cast %4 : vector<1x1x5x5x8xbf16> to vector<5x5x8xbf16>
    %c0_13 = arith.constant 0 : index
    %c0_14 = arith.constant 0 : index
    %c1_15 = arith.constant 1 : index
    %c1_16 = arith.constant 1 : index
    %c0_17 = arith.constant 0 : index
    %6 = vector.load %arg2[%c0_13, %c0_14, %c1_15, %c1_16, %c0_17] : memref<1x5x6x6x8xbf16, #tpu.memory_space<vmem>>, vector<1x1x5x5x8xbf16>
    %7 = vector.shape_cast %6 : vector<1x1x5x5x8xbf16> to vector<5x5x8xbf16>
    %c0_18 = arith.constant 0 : index
    %c1_19 = arith.constant 1 : index
    %c0_20 = arith.constant 0 : index
    %c0_21 = arith.constant 0 : index
    %c0_22 = arith.constant 0 : index
    %8 = vector.load %arg2[%c0_18, %c1_19, %c0_20, %c0_21, %c0_22] : memref<1x5x6x6x8xbf16, #tpu.memory_space<vmem>>, vector<1x1x5x5x8xbf16>
    %9 = vector.shape_cast %8 : vector<1x1x5x5x8xbf16> to vector<5x5x8xbf16>
    %c0_23 = arith.constant 0 : index
    %c1_24 = arith.constant 1 : index
    %c0_25 = arith.constant 0 : index
    %c1_26 = arith.constant 1 : index
    %c0_27 = arith.constant 0 : index
    %10 = vector.load %arg2[%c0_23, %c1_24, %c0_25, %c1_26, %c0_27] : memref<1x5x6x6x8xbf16, #tpu.memory_space<vmem>>, vector<1x1x5x5x8xbf16>
    %11 = vector.shape_cast %10 : vector<1x1x5x5x8xbf16> to vector<5x5x8xbf16>
    %c0_28 = arith.constant 0 : index
    %c1_29 = arith.constant 1 : index
    %c1_30 = arith.constant 1 : index
    %c0_31 = arith.constant 0 : index
    %c0_32 = arith.constant 0 : index
    %12 = vector.load %arg2[%c0_28, %c1_29, %c1_30, %c0_31, %c0_32] : memref<1x5x6x6x8xbf16, #tpu.memory_space<vmem>>, vector<1x1x5x5x8xbf16>
    %13 = vector.shape_cast %12 : vector<1x1x5x5x8xbf16> to vector<5x5x8xbf16>
    %c0_33 = arith.constant 0 : index
    %c1_34 = arith.constant 1 : index
    %c1_35 = arith.constant 1 : index
    %c1_36 = arith.constant 1 : index
    %c0_37 = arith.constant 0 : index
    %14 = vector.load %arg2[%c0_33, %c1_34, %c1_35, %c1_36, %c0_37] : memref<1x5x6x6x8xbf16, #tpu.memory_space<vmem>>, vector<1x1x5x5x8xbf16>
    %15 = vector.shape_cast %14 : vector<1x1x5x5x8xbf16> to vector<5x5x8xbf16>
    %16 = tpu.concatenate %1, %3, %5, %7, %9, %11, %13, %15 in 2 : vector<5x5x8xbf16>, vector<5x5x8xbf16>, vector<5x5x8xbf16>, vector<5x5x8xbf16>, vector<5x5x8xbf16>, vector<5x5x8xbf16>, vector<5x5x8xbf16>, vector<5x5x8xbf16> -> vector<5x5x64xbf16>
    %17 = vector.shape_cast %16 : vector<5x5x64xbf16> to vector<25x64xbf16>
    %c0_38 = arith.constant 0 : index
    %c1_39 = arith.constant 1 : index
    %c0_40 = arith.constant 0 : index
    %c0_41 = arith.constant 0 : index
    %c0_42 = arith.constant 0 : index
    %18 = vector.load %arg2[%c0_38, %c1_39, %c0_40, %c0_41, %c0_42] : memref<1x5x6x6x8xbf16, #tpu.memory_space<vmem>>, vector<1x1x5x5x8xbf16>
    %19 = vector.shape_cast %18 : vector<1x1x5x5x8xbf16> to vector<5x5x8xbf16>
    %c0_43 = arith.constant 0 : index
    %c1_44 = arith.constant 1 : index
    %c0_45 = arith.constant 0 : index
    %c1_46 = arith.constant 1 : index
    %c0_47 = arith.constant 0 : index
    %20 = vector.load %arg2[%c0_43, %c1_44, %c0_45, %c1_46, %c0_47] : memref<1x5x6x6x8xbf16, #tpu.memory_space<vmem>>, vector<1x1x5x5x8xbf16>
    %21 = vector.shape_cast %20 : vector<1x1x5x5x8xbf16> to vector<5x5x8xbf16>
    %c0_48 = arith.constant 0 : index
    %c1_49 = arith.constant 1 : index
    %c1_50 = arith.constant 1 : index
    %c0_51 = arith.constant 0 : index
    %c0_52 = arith.constant 0 : index
    %22 = vector.load %arg2[%c0_48, %c1_49, %c1_50, %c0_51, %c0_52] : memref<1x5x6x6x8xbf16, #tpu.memory_space<vmem>>, vector<1x1x5x5x8xbf16>
    %23 = vector.shape_cast %22 : vector<1x1x5x5x8xbf16> to vector<5x5x8xbf16>
    %c0_53 = arith.constant 0 : index
    %c1_54 = arith.constant 1 : index
    %c1_55 = arith.constant 1 : index
    %c1_56 = arith.constant 1 : index
    %c0_57 = arith.constant 0 : index
    %24 = vector.load %arg2[%c0_53, %c1_54, %c1_55, %c1_56, %c0_57] : memref<1x5x6x6x8xbf16, #tpu.memory_space<vmem>>, vector<1x1x5x5x8xbf16>
    %25 = vector.shape_cast %24 : vector<1x1x5x5x8xbf16> to vector<5x5x8xbf16>
    %c0_58 = arith.constant 0 : index
    %c2 = arith.constant 2 : index
    %c0_59 = arith.constant 0 : index
    %c0_60 = arith.constant 0 : index
    %c0_61 = arith.constant 0 : index
    %26 = vector.load %arg2[%c0_58, %c2, %c0_59, %c0_60, %c0_61] : memref<1x5x6x6x8xbf16, #tpu.memory_space<vmem>>, vector<1x1x5x5x8xbf16>
    %27 = vector.shape_cast %26 : vector<1x1x5x5x8xbf16> to vector<5x5x8xbf16>
    %c0_62 = arith.constant 0 : index
    %c2_63 = arith.constant 2 : index
    %c0_64 = arith.constant 0 : index
    %c1_65 = arith.constant 1 : index
    %c0_66 = arith.constant 0 : index
    %28 = vector.load %arg2[%c0_62, %c2_63, %c0_64, %c1_65, %c0_66] : memref<1x5x6x6x8xbf16, #tpu.memory_space<vmem>>, vector<1x1x5x5x8xbf16>
    %29 = vector.shape_cast %28 : vector<1x1x5x5x8xbf16> to vector<5x5x8xbf16>
    %c0_67 = arith.constant 0 : index
    %c2_68 = arith.constant 2 : index
    %c1_69 = arith.constant 1 : index
    %c0_70 = arith.constant 0 : index
    %c0_71 = arith.constant 0 : index
    %30 = vector.load %arg2[%c0_67, %c2_68, %c1_69, %c0_70, %c0_71] : memref<1x5x6x6x8xbf16, #tpu.memory_space<vmem>>, vector<1x1x5x5x8xbf16>
    %31 = vector.shape_cast %30 : vector<1x1x5x5x8xbf16> to vector<5x5x8xbf16>
    %c0_72 = arith.constant 0 : index
    %c2_73 = arith.constant 2 : index
    %c1_74 = arith.constant 1 : index
    %c1_75 = arith.constant 1 : index
    %c0_76 = arith.constant 0 : index
    %32 = vector.load %arg2[%c0_72, %c2_73, %c1_74, %c1_75, %c0_76] : memref<1x5x6x6x8xbf16, #tpu.memory_space<vmem>>, vector<1x1x5x5x8xbf16>
    %33 = vector.shape_cast %32 : vector<1x1x5x5x8xbf16> to vector<5x5x8xbf16>
    %34 = tpu.concatenate %19, %21, %23, %25, %27, %29, %31, %33 in 2 : vector<5x5x8xbf16>, vector<5x5x8xbf16>, vector<5x5x8xbf16>, vector<5x5x8xbf16>, vector<5x5x8xbf16>, vector<5x5x8xbf16>, vector<5x5x8xbf16>, vector<5x5x8xbf16> -> vector<5x5x64xbf16>
    %35 = vector.shape_cast %34 : vector<5x5x64xbf16> to vector<25x64xbf16>
    %c0_77 = arith.constant 0 : index
    %c2_78 = arith.constant 2 : index
    %c0_79 = arith.constant 0 : index
    %c0_80 = arith.constant 0 : index
    %c0_81 = arith.constant 0 : index
    %36 = vector.load %arg2[%c0_77, %c2_78, %c0_79, %c0_80, %c0_81] : memref<1x5x6x6x8xbf16, #tpu.memory_space<vmem>>, vector<1x1x5x5x8xbf16>
    %37 = vector.shape_cast %36 : vector<1x1x5x5x8xbf16> to vector<5x5x8xbf16>
    %c0_82 = arith.constant 0 : index
    %c2_83 = arith.constant 2 : index
    %c0_84 = arith.constant 0 : index
    %c1_85 = arith.constant 1 : index
    %c0_86 = arith.constant 0 : index
    %38 = vector.load %arg2[%c0_82, %c2_83, %c0_84, %c1_85, %c0_86] : memref<1x5x6x6x8xbf16, #tpu.memory_space<vmem>>, vector<1x1x5x5x8xbf16>
    %39 = vector.shape_cast %38 : vector<1x1x5x5x8xbf16> to vector<5x5x8xbf16>
    %c0_87 = arith.constant 0 : index
    %c2_88 = arith.constant 2 : index
    %c1_89 = arith.constant 1 : index
    %c0_90 = arith.constant 0 : index
    %c0_91 = arith.constant 0 : index
    %40 = vector.load %arg2[%c0_87, %c2_88, %c1_89, %c0_90, %c0_91] : memref<1x5x6x6x8xbf16, #tpu.memory_space<vmem>>, vector<1x1x5x5x8xbf16>
    %41 = vector.shape_cast %40 : vector<1x1x5x5x8xbf16> to vector<5x5x8xbf16>
    %c0_92 = arith.constant 0 : index
    %c2_93 = arith.constant 2 : index
    %c1_94 = arith.constant 1 : index
    %c1_95 = arith.constant 1 : index
    %c0_96 = arith.constant 0 : index
    %42 = vector.load %arg2[%c0_92, %c2_93, %c1_94, %c1_95, %c0_96] : memref<1x5x6x6x8xbf16, #tpu.memory_space<vmem>>, vector<1x1x5x5x8xbf16>
    %43 = vector.shape_cast %42 : vector<1x1x5x5x8xbf16> to vector<5x5x8xbf16>
    %c0_97 = arith.constant 0 : index
    %c3 = arith.constant 3 : index
    %c0_98 = arith.constant 0 : index
    %c0_99 = arith.constant 0 : index
    %c0_100 = arith.constant 0 : index
    %44 = vector.load %arg2[%c0_97, %c3, %c0_98, %c0_99, %c0_100] : memref<1x5x6x6x8xbf16, #tpu.memory_space<vmem>>, vector<1x1x5x5x8xbf16>
    %45 = vector.shape_cast %44 : vector<1x1x5x5x8xbf16> to vector<5x5x8xbf16>
    %c0_101 = arith.constant 0 : index
    %c3_102 = arith.constant 3 : index
    %c0_103 = arith.constant 0 : index
    %c1_104 = arith.constant 1 : index
    %c0_105 = arith.constant 0 : index
    %46 = vector.load %arg2[%c0_101, %c3_102, %c0_103, %c1_104, %c0_105] : memref<1x5x6x6x8xbf16, #tpu.memory_space<vmem>>, vector<1x1x5x5x8xbf16>
    %47 = vector.shape_cast %46 : vector<1x1x5x5x8xbf16> to vector<5x5x8xbf16>
    %c0_106 = arith.constant 0 : index
    %c3_107 = arith.constant 3 : index
    %c1_108 = arith.constant 1 : index
    %c0_109 = arith.constant 0 : index
    %c0_110 = arith.constant 0 : index
    %48 = vector.load %arg2[%c0_106, %c3_107, %c1_108, %c0_109, %c0_110] : memref<1x5x6x6x8xbf16, #tpu.memory_space<vmem>>, vector<1x1x5x5x8xbf16>
    %49 = vector.shape_cast %48 : vector<1x1x5x5x8xbf16> to vector<5x5x8xbf16>
    %c0_111 = arith.constant 0 : index
    %c3_112 = arith.constant 3 : index
    %c1_113 = arith.constant 1 : index
    %c1_114 = arith.constant 1 : index
    %c0_115 = arith.constant 0 : index
    %50 = vector.load %arg2[%c0_111, %c3_112, %c1_113, %c1_114, %c0_115] : memref<1x5x6x6x8xbf16, #tpu.memory_space<vmem>>, vector<1x1x5x5x8xbf16>
    %51 = vector.shape_cast %50 : vector<1x1x5x5x8xbf16> to vector<5x5x8xbf16>
    %52 = tpu.concatenate %37, %39, %41, %43, %45, %47, %49, %51 in 2 : vector<5x5x8xbf16>, vector<5x5x8xbf16>, vector<5x5x8xbf16>, vector<5x5x8xbf16>, vector<5x5x8xbf16>, vector<5x5x8xbf16>, vector<5x5x8xbf16>, vector<5x5x8xbf16> -> vector<5x5x64xbf16>
    %53 = vector.shape_cast %52 : vector<5x5x64xbf16> to vector<25x64xbf16>
    %c0_116 = arith.constant 0 : index
    %c3_117 = arith.constant 3 : index
    %c0_118 = arith.constant 0 : index
    %c0_119 = arith.constant 0 : index
    %c0_120 = arith.constant 0 : index
    %54 = vector.load %arg2[%c0_116, %c3_117, %c0_118, %c0_119, %c0_120] : memref<1x5x6x6x8xbf16, #tpu.memory_space<vmem>>, vector<1x1x5x5x8xbf16>
    %55 = vector.shape_cast %54 : vector<1x1x5x5x8xbf16> to vector<5x5x8xbf16>
    %c0_121 = arith.constant 0 : index
    %c3_122 = arith.constant 3 : index
    %c0_123 = arith.constant 0 : index
    %c1_124 = arith.constant 1 : index
    %c0_125 = arith.constant 0 : index
    %56 = vector.load %arg2[%c0_121, %c3_122, %c0_123, %c1_124, %c0_125] : memref<1x5x6x6x8xbf16, #tpu.memory_space<vmem>>, vector<1x1x5x5x8xbf16>
    %57 = vector.shape_cast %56 : vector<1x1x5x5x8xbf16> to vector<5x5x8xbf16>
    %c0_126 = arith.constant 0 : index
    %c3_127 = arith.constant 3 : index
    %c1_128 = arith.constant 1 : index
    %c0_129 = arith.constant 0 : index
    %c0_130 = arith.constant 0 : index
    %58 = vector.load %arg2[%c0_126, %c3_127, %c1_128, %c0_129, %c0_130] : memref<1x5x6x6x8xbf16, #tpu.memory_space<vmem>>, vector<1x1x5x5x8xbf16>
    %59 = vector.shape_cast %58 : vector<1x1x5x5x8xbf16> to vector<5x5x8xbf16>
    %c0_131 = arith.constant 0 : index
    %c3_132 = arith.constant 3 : index
    %c1_133 = arith.constant 1 : index
    %c1_134 = arith.constant 1 : index
    %c0_135 = arith.constant 0 : index
    %60 = vector.load %arg2[%c0_131, %c3_132, %c1_133, %c1_134, %c0_135] : memref<1x5x6x6x8xbf16, #tpu.memory_space<vmem>>, vector<1x1x5x5x8xbf16>
    %61 = vector.shape_cast %60 : vector<1x1x5x5x8xbf16> to vector<5x5x8xbf16>
    %c0_136 = arith.constant 0 : index
    %c4 = arith.constant 4 : index
    %c0_137 = arith.constant 0 : index
    %c0_138 = arith.constant 0 : index
    %c0_139 = arith.constant 0 : index
    %62 = vector.load %arg2[%c0_136, %c4, %c0_137, %c0_138, %c0_139] : memref<1x5x6x6x8xbf16, #tpu.memory_space<vmem>>, vector<1x1x5x5x8xbf16>
    %63 = vector.shape_cast %62 : vector<1x1x5x5x8xbf16> to vector<5x5x8xbf16>
    %c0_140 = arith.constant 0 : index
    %c4_141 = arith.constant 4 : index
    %c0_142 = arith.constant 0 : index
    %c1_143 = arith.constant 1 : index
    %c0_144 = arith.constant 0 : index
    %64 = vector.load %arg2[%c0_140, %c4_141, %c0_142, %c1_143, %c0_144] : memref<1x5x6x6x8xbf16, #tpu.memory_space<vmem>>, vector<1x1x5x5x8xbf16>
    %65 = vector.shape_cast %64 : vector<1x1x5x5x8xbf16> to vector<5x5x8xbf16>
    %c0_145 = arith.constant 0 : index
    %c4_146 = arith.constant 4 : index
    %c1_147 = arith.constant 1 : index
    %c0_148 = arith.constant 0 : index
    %c0_149 = arith.constant 0 : index
    %66 = vector.load %arg2[%c0_145, %c4_146, %c1_147, %c0_148, %c0_149] : memref<1x5x6x6x8xbf16, #tpu.memory_space<vmem>>, vector<1x1x5x5x8xbf16>
    %67 = vector.shape_cast %66 : vector<1x1x5x5x8xbf16> to vector<5x5x8xbf16>
    %c0_150 = arith.constant 0 : index
    %c4_151 = arith.constant 4 : index
    %c1_152 = arith.constant 1 : index
    %c1_153 = arith.constant 1 : index
    %c0_154 = arith.constant 0 : index
    %68 = vector.load %arg2[%c0_150, %c4_151, %c1_152, %c1_153, %c0_154] : memref<1x5x6x6x8xbf16, #tpu.memory_space<vmem>>, vector<1x1x5x5x8xbf16>
    %69 = vector.shape_cast %68 : vector<1x1x5x5x8xbf16> to vector<5x5x8xbf16>
    %70 = tpu.concatenate %55, %57, %59, %61, %63, %65, %67, %69 in 2 : vector<5x5x8xbf16>, vector<5x5x8xbf16>, vector<5x5x8xbf16>, vector<5x5x8xbf16>, vector<5x5x8xbf16>, vector<5x5x8xbf16>, vector<5x5x8xbf16>, vector<5x5x8xbf16> -> vector<5x5x64xbf16>
    %71 = vector.shape_cast %70 : vector<5x5x64xbf16> to vector<25x64xbf16>
    %c0_155 = arith.constant 0 : index
    %c4_156 = arith.constant 4 : index
    %c0_157 = arith.constant 0 : index
    %c0_158 = arith.constant 0 : index
    %c0_159 = arith.constant 0 : index
    %72 = vector.load %arg2[%c0_155, %c4_156, %c0_157, %c0_158, %c0_159] : memref<1x5x6x6x8xbf16, #tpu.memory_space<vmem>>, vector<1x1x5x5x8xbf16>
    %73 = vector.shape_cast %72 : vector<1x1x5x5x8xbf16> to vector<5x5x8xbf16>
    %c0_160 = arith.constant 0 : index
    %c4_161 = arith.constant 4 : index
    %c0_162 = arith.constant 0 : index
    %c1_163 = arith.constant 1 : index
    %c0_164 = arith.constant 0 : index
    %74 = vector.load %arg2[%c0_160, %c4_161, %c0_162, %c1_163, %c0_164] : memref<1x5x6x6x8xbf16, #tpu.memory_space<vmem>>, vector<1x1x5x5x8xbf16>
    %75 = vector.shape_cast %74 : vector<1x1x5x5x8xbf16> to vector<5x5x8xbf16>
    %c0_165 = arith.constant 0 : index
    %c4_166 = arith.constant 4 : index
    %c1_167 = arith.constant 1 : index
    %c0_168 = arith.constant 0 : index
    %c0_169 = arith.constant 0 : index
    %76 = vector.load %arg2[%c0_165, %c4_166, %c1_167, %c0_168, %c0_169] : memref<1x5x6x6x8xbf16, #tpu.memory_space<vmem>>, vector<1x1x5x5x8xbf16>
    %77 = vector.shape_cast %76 : vector<1x1x5x5x8xbf16> to vector<5x5x8xbf16>
    %c0_170 = arith.constant 0 : index
    %c4_171 = arith.constant 4 : index
    %c1_172 = arith.constant 1 : index
    %c1_173 = arith.constant 1 : index
    %c0_174 = arith.constant 0 : index
    %78 = vector.load %arg2[%c0_170, %c4_171, %c1_172, %c1_173, %c0_174] : memref<1x5x6x6x8xbf16, #tpu.memory_space<vmem>>, vector<1x1x5x5x8xbf16>
    %79 = vector.shape_cast %78 : vector<1x1x5x5x8xbf16> to vector<5x5x8xbf16>
    %c0_175 = arith.constant 0 : index
    %c0_176 = arith.constant 0 : index
    %c0_177 = arith.constant 0 : index
    %c0_178 = arith.constant 0 : index
    %c0_179 = arith.constant 0 : index
    %80 = vector.load %arg3[%c0_175, %c0_176, %c0_177, %c0_178, %c0_179] : memref<1x1x6x6x8xbf16, #tpu.memory_space<vmem>>, vector<1x1x5x5x8xbf16>
    %81 = vector.shape_cast %80 : vector<1x1x5x5x8xbf16> to vector<5x5x8xbf16>
    %c0_180 = arith.constant 0 : index
    %c0_181 = arith.constant 0 : index
    %c0_182 = arith.constant 0 : index
    %c1_183 = arith.constant 1 : index
    %c0_184 = arith.constant 0 : index
    %82 = vector.load %arg3[%c0_180, %c0_181, %c0_182, %c1_183, %c0_184] : memref<1x1x6x6x8xbf16, #tpu.memory_space<vmem>>, vector<1x1x5x5x8xbf16>
    %83 = vector.shape_cast %82 : vector<1x1x5x5x8xbf16> to vector<5x5x8xbf16>
    %c0_185 = arith.constant 0 : index
    %c0_186 = arith.constant 0 : index
    %c1_187 = arith.constant 1 : index
    %c0_188 = arith.constant 0 : index
    %c0_189 = arith.constant 0 : index
    %84 = vector.load %arg3[%c0_185, %c0_186, %c1_187, %c0_188, %c0_189] : memref<1x1x6x6x8xbf16, #tpu.memory_space<vmem>>, vector<1x1x5x5x8xbf16>
    %85 = vector.shape_cast %84 : vector<1x1x5x5x8xbf16> to vector<5x5x8xbf16>
    %c0_190 = arith.constant 0 : index
    %c0_191 = arith.constant 0 : index
    %c1_192 = arith.constant 1 : index
    %c1_193 = arith.constant 1 : index
    %c0_194 = arith.constant 0 : index
    %86 = vector.load %arg3[%c0_190, %c0_191, %c1_192, %c1_193, %c0_194] : memref<1x1x6x6x8xbf16, #tpu.memory_space<vmem>>, vector<1x1x5x5x8xbf16>
    %87 = vector.shape_cast %86 : vector<1x1x5x5x8xbf16> to vector<5x5x8xbf16>
    %88 = tpu.concatenate %73, %75, %77, %79, %81, %83, %85, %87 in 2 : vector<5x5x8xbf16>, vector<5x5x8xbf16>, vector<5x5x8xbf16>, vector<5x5x8xbf16>, vector<5x5x8xbf16>, vector<5x5x8xbf16>, vector<5x5x8xbf16>, vector<5x5x8xbf16> -> vector<5x5x64xbf16>
    %89 = vector.shape_cast %88 : vector<5x5x64xbf16> to vector<25x64xbf16>
    %90 = tpu.concatenate %17, %35, %53, %71, %89 in 0 : vector<25x64xbf16>, vector<25x64xbf16>, vector<25x64xbf16>, vector<25x64xbf16>, vector<25x64xbf16> -> vector<125x64xbf16>
    %c0_195 = arith.constant 0 : index
    %c0_196 = arith.constant 0 : index
    %91 = vector.load %arg4[%c0_195, %c0_196] : memref<64x128xbf16, #tpu.memory_space<vmem>>, vector<64x128xbf16>
    %cst = arith.constant dense<0.000000e+00> : vector<125x128xf32>
    %92 = tpu.matmul %90, %91, %cst {dimension_numbers = #tpu.dot_dimension_numbers<[1], [0], [0], [1], [0, 0, 1, 1], [], []>} : vector<125x64xbf16>, vector<64x128xbf16>, vector<125x128xf32> -> vector<125x128xf32>
    %93 = arith.truncf %92 : vector<125x128xf32> to vector<125x128xbf16>
    %c0_197 = arith.constant 0 : index
    %c0_198 = arith.constant 0 : index
    %c0_199 = arith.constant 0 : index
    %c0_200 = arith.constant 0 : index
    %94 = vector.load %arg5[%c0_197, %c0_198, %c0_199, %c0_200] : memref<1x1x125x128xbf16, #tpu.memory_space<vmem>>, vector<1x1x125x128xbf16>
    %95 = vector.shape_cast %94 : vector<1x1x125x128xbf16> to vector<125x128xbf16>
    %96 = vector.shape_cast %93 : vector<125x128xbf16> to vector<1x1x125x128xbf16>
    tpu.vector_store %arg5[%c0_197, %c0_198, %c0_199, %c0_200], %96 {strides = array<i32>} : memref<1x1x125x128xbf16, #tpu.memory_space<vmem>>, vector<1x1x125x128xbf16>,
    return
  }
  func.func @transform_0(%arg0: i32, %arg1: i32) -> (i32, i32, i32, i32, i32) {
    %c0_i32 = arith.constant 0 : i32
    %c0_i32_0 = arith.constant 0 : i32
    %c0_i32_1 = arith.constant 0 : i32
    %c0_i32_2 = arith.constant 0 : i32
    return %arg0, %arg1, %c0_i32, %c0_i32_0, %c0_i32_1 : i32, i32, i32, i32, i32
  }
  func.func @transform_1(%arg0: i32, %arg1: i32) -> (i32, i32, i32, i32, i32) {
    %c5_i32 = arith.constant 5 : i32
    %0 = arith.muli %arg1, %c5_i32 : i32
    %c5_i32_0 = arith.constant 5 : i32
    %1 = arith.addi %0, %c5_i32_0 : i32
    %c0_i32 = arith.constant 0 : i32
    %c0_i32_1 = arith.constant 0 : i32
    %c0_i32_2 = arith.constant 0 : i32
    %c0_i32_3 = arith.constant 0 : i32
    return %arg0, %1, %c0_i32, %c0_i32_1, %c0_i32_2 : i32, i32, i32, i32, i32
  }
  func.func @transform_2(%arg0: i32, %arg1: i32) -> (i32, i32) {
    %c0_i32 = arith.constant 0 : i32
    %c0_i32_0 = arith.constant 0 : i32
    %c0_i32_1 = arith.constant 0 : i32
    return %c0_i32, %c0_i32_0 : i32, i32
  }
  func.func @transform_3(%arg0: i32, %arg1: i32) -> (i32, i32, i32, i32) {
    %c0_i32 = arith.constant 0 : i32
    %c0_i32_0 = arith.constant 0 : i32
    %c0_i32_1 = arith.constant 0 : i32
    return %arg0, %arg1, %c0_i32, %c0_i32_0 : i32, i32, i32, i32
  }
}

</mosaic_0001>

<llo_original>
// kernel: upsample_forward.1
$region0: #{upsample_forward.1}
  #allocation0 [shape = 'u32[]', space=smem, size = 0x4, offset = 0x4, fixed_abs, tag = 'smem constant byte address 0x4 - core index']
  #allocation1 [shape = 'u32[144,128]{1,0:T(1,128)}', space=vmem, size = 0x12000, scoped, tag = 'internal scratch']
  %s0 = inlined_call_operand.vmem [shape: bf16[2,6,6,6,8], index: 0, kind: input, shape index: {}, may-alias: {0,1}]
  %s1 = inlined_call_operand.vmem [shape: bf16[2,6,6,6,8], index: 1, kind: input, shape index: {}, may-alias: {0,1}]
  %s2 = inlined_call_operand.vmem [shape: bf16[64,128], index: 2, kind: input, shape index: {}]
  %s3 = inlined_call_operand.vmem [shape: bf16[2,1,125,128], index: 3, kind: output, shape index: {}]
  %s4 = sld [smem:[#allocation0]]
  $region45: #{upsample_forward.1} parent=0
    _
  %s6 = ssub.s32 1, %s4
  %s7 = scalar_select 0, %s6, %s4
  loop: start=0, step=1, limit=4
  $region2: #{upsample_forward.1} parent=0 // loop_pre_header
    _
  $region3: #{upsample_forward.1} parent=0 // loop_header
    %s9 = sphi 0, %s13
    %p10 = scmp.ge.s32.totalorder %s9, 4
    %s16 = sphi 0, %s28
    %s17 = sphi 0, %s24
    %s18 = sphi 0, %s16
    %s19 = sphi 0, %s17
    %s20 = sphi 0, %s18
    %s21 = sphi 0, %s19
    %s33 = sphi 0, %s35
    %s36 = sphi 0, %s33
    %s37 = sphi 0, %s36
    %s53 = sphi 0, %s37
    %s65 = sphi 0, %s67
    %s68 = sphi 0, %s65
    %s69 = sphi 0, %s68
    %s85 = sphi 0, %s69
    %s89 = sphi 0, %s89
    %s91 = sphi 0, %s89
    %s92 = sphi 0, %s91
    %s106 = sphi 0, %s92
    %s114 = sphi 0, %s116
    %s117 = sphi 0, %s114
    %s118 = sphi 0, %s117
    %s134 = sphi 0, %s118
  $region4: #{upsample_forward.1} parent=0 // loop_header_branch
    %12 = sbr.rel (%p10) target = $region8
  $region5: #{upsample_forward.1} parent=0 // loop_body
    %s14 = ssub.s32 %s9, 1
    %s15 = ssub.s32 %s9, 2
    %s22 = sadd.s32 1, %s17
    %p23 = scmp.ge.s32.totalorder %s22, 1
    %s24 = scalar_select %p23, 0, %s22
    %s25 = sadd.s32 1, %s16
    %s26 = scalar_select %p23, %s25, %s16
    %p27 = scmp.ge.s32.totalorder %s26, 2
    %s28 = scalar_select %p27, 0, %s26
    %s29 = ssub.s32 %s16, %s28
    %s30 = ssub.s32 %s17, %s24
    %s31 = sor.u32 %s29, %s30
    %p32 = scmp.eq.s32.totalorder %s31, 0
    %s34 = sadd.s32 %s33, 1
    %s35 = scalar_select %p32, %s33, %s34
    %p38 = pneg %p32
    %p39 = scmp.eq.s32.totalorder %s9, 1
    %p40 = por %p38, %p39
    %p41 = scmp.ne.s32.totalorder %s33, %s36
    %p42 = scmp.eq.s32.totalorder %s9, 0
    %p43 = por %p41, %p42
    %p44 = scmp.ne.s32.totalorder %s33, %s36
    %p45 = scmp.eq.s32.totalorder %s14, 1
    %p46 = por %p44, %p45
    %p47 = scmp.ne.s32.totalorder %s36, %s37
    %p48 = scmp.eq.s32.totalorder %s14, 0
    %p49 = por %p47, %p48
    %p50 = scmp.ne.s32.totalorder %s36, %s37
    %p51 = scmp.eq.s32.totalorder %s15, 1
    %p52 = por %p50, %p51
    %p54 = scmp.ne.s32.totalorder %s37, %s53
    %p55 = scmp.eq.s32.totalorder %s15, 0
    %p56 = por %p54, %p55
    %s57 = smul.u32 %s17, 5
    %s58 = sadd.s32 %s57, 5
    %s59 = smul.u32 %s24, 5
    %s60 = sadd.s32 %s59, 5
    %s61 = ssub.s32 %s16, %s28
    %s62 = ssub.s32 %s58, %s60
    %s63 = sor.u32 %s61, %s62
    %p64 = scmp.eq.s32.totalorder %s63, 0
    %s66 = sadd.s32 %s65, 1
    %s67 = scalar_select %p64, %s65, %s66
    %p70 = pneg %p64
    %p71 = scmp.eq.s32.totalorder %s9, 1
    %p72 = por %p70, %p71
    %p73 = scmp.ne.s32.totalorder %s65, %s68
    %p74 = scmp.eq.s32.totalorder %s9, 0
    %p75 = por %p73, %p74
    %p76 = scmp.ne.s32.totalorder %s65, %s68
    %p77 = scmp.eq.s32.totalorder %s14, 1
    %p78 = por %p76, %p77
    %p79 = scmp.ne.s32.totalorder %s68, %s69
    %p80 = scmp.eq.s32.totalorder %s14, 0
    %p81 = por %p79, %p80
    %p82 = scmp.ne.s32.totalorder %s68, %s69
    %p83 = scmp.eq.s32.totalorder %s15, 1
    %p84 = por %p82, %p83
    %p86 = scmp.ne.s32.totalorder %s69, %s85
    %p87 = scmp.eq.s32.totalorder %s15, 0
    %p88 = por %p86, %p87
    %s90 = sadd.s32 %s89, 1
    %p93 = scmp.eq.s32.totalorder %s9, 1
    %p94 = scmp.ne.s32.totalorder %s89, %s91
    %p95 = scmp.eq.s32.totalorder %s9, 0
    %p96 = por %p94, %p95
    %p97 = scmp.ne.s32.totalorder %s89, %s91
    %p98 = scmp.eq.s32.totalorder %s14, 1
    %p99 = por %p97, %p98
    %p100 = scmp.ne.s32.totalorder %s91, %s92
    %p101 = scmp.eq.s32.totalorder %s14, 0
    %p102 = por %p100, %p101
    %p103 = scmp.ne.s32.totalorder %s91, %s92
    %p104 = scmp.eq.s32.totalorder %s15, 1
    %p105 = por %p103, %p104
    %p107 = scmp.ne.s32.totalorder %s92, %s106
    %p108 = scmp.eq.s32.totalorder %s15, 0
    %p109 = por %p107, %p108
    %s110 = ssub.s32 %s16, %s28
    %s111 = ssub.s32 %s17, %s24
    %s112 = sor.u32 %s110, %s111
    %p113 = scmp.eq.s32.totalorder %s112, 0
    %s115 = sadd.s32 %s114, 1
    %s116 = scalar_select %p113, %s114, %s115
    %p119 = pneg %p113
    %p120 = scmp.eq.s32.totalorder %s9, 1
    %p121 = por %p119, %p120
    %p122 = scmp.ne.s32.totalorder %s114, %s117
    %p123 = scmp.eq.s32.totalorder %s9, 0
    %p124 = por %p122, %p123
    %p125 = scmp.ne.s32.totalorder %s114, %s117
    %p126 = scmp.eq.s32.totalorder %s14, 1
    %p127 = por %p125, %p126
    %p128 = scmp.ne.s32.totalorder %s117, %s118
    %p129 = scmp.eq.s32.totalorder %s14, 0
    %p130 = por %p128, %p129
    %p131 = scmp.ne.s32.totalorder %s117, %s118
    %p132 = scmp.eq.s32.totalorder %s15, 1
    %p133 = por %p131, %p132
    %p135 = scmp.ne.s32.totalorder %s118, %s134
    %p136 = scmp.eq.s32.totalorder %s15, 0
    %p137 = por %p135, %p136
    %p138 = scmp.le.s32.totalorder 1, %s9
    %p139 = scmp.lt.s32.totalorder %s9, 3
    %p140 = pnand %p138, %p139
    %p141 = pneg %p140
    // Predicated region
    $region9: #{upsample_forward.1} parent=5 // pred_check
      _
    $region10: #{upsample_forward.1} parent=5 // pred_check_branch
      %143 = sbr.rel (%p140) target = $region12
    $region11: #{upsample_forward.1} parent=5 // pred_region
      %s144 = ssub.s32 %s9, 1
      // Predicated region
      $region13: #{upsample_forward.1} parent=11 // pred_check
        %p145 = pneg %p102
      $region14: #{upsample_forward.1} parent=11 // pred_check_branch
        %147 = sbr.rel (%p145) target = $region16
      $region15: #{upsample_forward.1} parent=11 // pred_region
        _
      $region16: #{upsample_forward.1} parent=11 // pred_fallthru
        _
    $region12: #{upsample_forward.1} parent=5 // pred_fallthru
      _
    %p148 = scmp.lt.s32.totalorder %s9, 2
    // Predicated region
    $region17: #{upsample_forward.1} parent=5 // pred_check
      %p149 = pneg %p148
    $region18: #{upsample_forward.1} parent=5 // pred_check_branch
      %151 = sbr.rel (%p149) target = $region20
    $region19: #{upsample_forward.1} parent=5 // pred_region
      // Predicated region
      $region21: #{upsample_forward.1} parent=19 // pred_check
        %p152 = pneg %p43
      $region22: #{upsample_forward.1} parent=19 // pred_check_branch
        %154 = sbr.rel (%p152) target = $region24
      $region23: #{upsample_forward.1} parent=19 // pred_region
        %s155 = smul.u32 5, %s17
        %s156 = ssub.s32 6, %s155
        %p157 = scmp.lt.s32.totalorder %s156, 5
        %s158 = scalar_select %p157, %s156, 5
        %s159 = smul.u32 64, %s158
        %s160 = smul.u32 %s159, 6
        %p161 = scmp.lt.s32.totalorder %s16, 1
        %s162 = scalar_select %p161, %s16, 1
        %p163 = scmp.lt.s32.totalorder %s155, 5
        %s164 = scalar_select %p163, %s155, 5
        %s165 = smul.addr %s164, 6
        %s166 = smul.addr %s162, 36
        %s167 = sadd.s32 %s165, %s166
        %s168 = smul.addr %s167, 4
        %s169 = scalar_lea.vmem %s0, %s168
        %s170 = smul.u32 5, %s17
        %s171 = ssub.s32 6, %s170
        %p172 = scmp.lt.s32.totalorder %s171, 5
        %s173 = scalar_select %p172, %s171, 5
        %s174 = smul.u32 64, %s173
        %s175 = smul.u32 %s174, 6
      $region24: #{upsample_forward.1} parent=19 // pred_fallthru
        _
      // Predicated region
      $region25: #{upsample_forward.1} parent=19 // pred_check
        %p176 = pneg %p75
      $region26: #{upsample_forward.1} parent=19 // pred_check_branch
        %178 = sbr.rel (%p176) target = $region28
      $region27: #{upsample_forward.1} parent=19 // pred_region
        %s179 = smul.u32 %s17, 5
        %s180 = sadd.s32 %s179, 5
        %p181 = scmp.lt.s32.totalorder %s16, 1
        %s182 = scalar_select %p181, %s16, 1
        %p183 = scmp.lt.s32.totalorder %s180, 5
        %s184 = scalar_select %p183, %s180, 5
        %s185 = smul.addr %s184, 6
        %s186 = smul.addr %s182, 36
        %s187 = sadd.s32 %s185, %s186
        %s188 = smul.addr %s187, 4
        %s189 = scalar_lea.vmem %s1, %s188
        %s190 = smul.u32 %s17, 5
        %s191 = sadd.s32 %s190, 5
      $region28: #{upsample_forward.1} parent=19 // pred_fallthru
        _
    $region20: #{upsample_forward.1} parent=5 // pred_fallthru
      _
    %p192 = scmp.le.s32.totalorder 1, %s9
    %p193 = scmp.lt.s32.totalorder %s9, 3
    %p194 = pnand %p192, %p193
    %p195 = pneg %p194
    // Predicated region
    $region29: #{upsample_forward.1} parent=5 // pred_check
      _
    $region30: #{upsample_forward.1} parent=5 // pred_check_branch
      %197 = sbr.rel (%p194) target = $region32
    $region31: #{upsample_forward.1} parent=5 // pred_region
      %s198 = ssub.s32 %s9, 1
      %s199 = smul.u32 5, %s19
      %s200 = ssub.s32 6, %s199
      %p201 = scmp.lt.s32.totalorder %s200, 5
      %s202 = scalar_select %p201, %s200, 5
      %s203 = smul.u32 64, %s202
      %s204 = smul.u32 %s203, 6
      %p205 = scmp.lt.s32.totalorder %s18, 1
      %s206 = scalar_select %p205, %s18, 1
      %p207 = scmp.lt.s32.totalorder %s199, 5
      %s208 = scalar_select %p207, %s199, 5
      %s209 = smul.addr %s208, 6
      %s210 = smul.addr %s206, 36
      %s211 = sadd.s32 %s209, %s210
      %s212 = smul.addr %s211, 4
      %s213 = scalar_lea.vmem %s0, %s212
      %p214 = pneg %p49
      %p215 = pneg %p46
      %s216 = smul.u32 %s19, 5
      %s217 = sadd.s32 %s216, 5
      %p218 = scmp.lt.s32.totalorder %s18, 1
      %s219 = scalar_select %p218, %s18, 1
      %p220 = scmp.lt.s32.totalorder %s217, 5
      %s221 = scalar_select %p220, %s217, 5
      %s222 = smul.addr %s221, 6
      %s223 = smul.addr %s219, 36
      %s224 = sadd.s32 %s222, %s223
      %s225 = smul.addr %s224, 4
      %s226 = scalar_lea.vmem %s1, %s225
      %p227 = pneg %p81
      %p228 = pneg %p78
      %p229 = pneg %p102
      %p230 = pneg %p99
      %p231 = pneg %p130
      %p232 = pneg %p127
      %p233 = scmp.lt.s32.totalorder %s18, 1
      %s234 = scalar_select %p233, %s18, 1
      %p235 = scmp.lt.s32.totalorder %s19, 0
      %s236 = scalar_select %p235, %s19, 0
      %s237 = smul.addr %s236, 16
      %s238 = smul.addr %s234, 16
      %s239 = sadd.s32 %s237, %s238
      %s240 = smul.addr %s239, 4
      %s241 = scalar_lea.vmem %s3, %s240
      %s242 = smul.u32 5, %s19
      %s243 = ssub.s32 6, %s242
      %p244 = scmp.lt.s32.totalorder %s243, 5
      %s245 = scalar_select %p244, %s243, 5
      %s246 = smul.u32 64, %s245
      %s247 = smul.u32 %s246, 6
      %p248 = scmp.lt.s32.totalorder %s18, 1
      %s249 = scalar_select %p248, %s18, 1
      %p250 = scmp.lt.s32.totalorder %s242, 5
      %s251 = scalar_select %p250, %s242, 5
      %s252 = smul.addr %s251, 6
      %s253 = smul.addr %s249, 36
      %s254 = sadd.s32 %s252, %s253
      %s255 = smul.addr %s254, 4
      %s256 = scalar_lea.vmem %s0, %s255
      %s257 = smul.u32 5, %s19
      %s258 = ssub.s32 6, %s257
      %p259 = scmp.lt.s32.totalorder %s258, 5
      %s260 = scalar_select %p259, %s258, 5
      %s261 = smul.u32 64, %s260
      %s262 = smul.u32 %s261, 6
      %s263 = smul.u32 %s19, 5
      %s264 = sadd.s32 %s263, 5
      %p265 = scmp.lt.s32.totalorder %s18, 1
      %s266 = scalar_select %p265, %s18, 1
      %p267 = scmp.lt.s32.totalorder %s264, 5
      %s268 = scalar_select %p267, %s264, 5
      %s269 = smul.addr %s268, 6
      %s270 = smul.addr %s266, 36
      %s271 = sadd.s32 %s269, %s270
      %s272 = smul.addr %s271, 4
      %s273 = scalar_lea.vmem %s1, %s272
      %s274 = smul.u32 %s19, 5
      %s275 = sadd.s32 %s274, 5
      %p276 = scmp.lt.s32.totalorder %s18, 1
      %s277 = scalar_select %p276, %s18, 1
      %p278 = scmp.lt.s32.totalorder %s19, 0
      %s279 = scalar_select %p278, %s19, 0
      %s280 = smul.addr %s279, 16
      %s281 = smul.addr %s277, 16
      %s282 = sadd.s32 %s280, %s281
      %s283 = smul.addr %s282, 4
      %s284 = scalar_lea.vmem %s3, %s283
      %v286 = vld [vmem:[%s256] sm:$0x7]
      %v287 = vld [vmem:[%s256 + $0x4] sm:$0x7]
      %v288 = vld [vmem:[%s256 + $0x8] sm:$0x7]
      %v289 = vld [vmem:[%s256 + $0xc] sm:$0x7]
      %v290 = vld [vmem:[%s256 + $0x10] sm:$0x7]
      %s291 = scalar_lea.vmem %s256, 4
      %v292 = vld [vmem:[%s291] sm:$0x7]
      %v293 = vld [vmem:[%s291 + $0x4] sm:$0x7]
      %v294 = vld [vmem:[%s291 + $0x8] sm:$0x7]
      %v295 = vld [vmem:[%s291 + $0xc] sm:$0x7]
      %v296 = vld [vmem:[%s291 + $0x10] sm:$0x7]
      %s297 = scalar_lea.vmem %s256, 24
      %v298 = vld [vmem:[%s297] sm:$0x7]
      %v299 = vld [vmem:[%s297 + $0x4] sm:$0x7]
      %v300 = vld [vmem:[%s297 + $0x8] sm:$0x7]
      %v301 = vld [vmem:[%s297 + $0xc] sm:$0x7]
      %v302 = vld [vmem:[%s297 + $0x10] sm:$0x7]
      %s303 = scalar_lea.vmem %s256, 28
      %v304 = vld [vmem:[%s303] sm:$0x7]
      %v305 = vld [vmem:[%s303 + $0x4] sm:$0x7]
      %v306 = vld [vmem:[%s303 + $0x8] sm:$0x7]
      %v307 = vld [vmem:[%s303 + $0xc] sm:$0x7]
      %v308 = vld [vmem:[%s303 + $0x10] sm:$0x7]
      %v314 = vunpack.c.l.b16 %v286
      %v315 = vunpack.c.l.b16 %v287
      %v316 = vunpack.c.l.b16 %v288
      %v317 = vunpack.c.l.b16 %v289
      %v318 = vunpack.c.l.b16 %v290
      %v319 = vpack.c.b16 %v314, %v314
      %v320 = vpack.c.b16 %v315, %v315
      %v321 = vpack.c.b16 %v316, %v316
      %v322 = vpack.c.b16 %v317, %v317
      %v323 = vpack.c.b16 %v318, %v318
      %v325 = vshrl.u32 %v319, 16
      %v327 = vshll.u32 %v319, 16
      %v329 = vrot.slane %v327, 1
      %v330 = vor.u32 %v325, %v329
      %v332 = vshrl.u32 %v320, 16
      %v334 = vshll.u32 %v320, 16
      %v336 = vrot.slane %v334, 1
      %v337 = vor.u32 %v332, %v336
      %v339 = vshrl.u32 %v321, 16
      %v341 = vshll.u32 %v321, 16
      %v343 = vrot.slane %v341, 1
      %v344 = vor.u32 %v339, %v343
      %v346 = vshrl.u32 %v322, 16
      %v348 = vshll.u32 %v322, 16
      %v350 = vrot.slane %v348, 1
      %v351 = vor.u32 %v346, %v350
      %v353 = vshrl.u32 %v323, 16
      %v355 = vshll.u32 %v323, 16
      %v357 = vrot.slane %v355, 1
      %v358 = vor.u32 %v353, %v357
      %359 = vrot.lane.b32.xlu0 %v330, 8
      %v360 = vpop.permute.xlu0 %359
      %361 = vrot.lane.b32.xlu0 %v337, 8
      %v362 = vpop.permute.xlu0 %361
      %363 = vrot.lane.b32.xlu0 %v344, 8
      %v364 = vpop.permute.xlu0 %363
      %365 = vrot.lane.b32.xlu0 %v351, 8
      %v366 = vpop.permute.xlu0 %365
      %367 = vrot.lane.b32.xlu0 %v358, 8
      %v368 = vpop.permute.xlu0 %367
      %v374 = vunpack.c.l.b16 %v292
      %v375 = vunpack.c.l.b16 %v293
      %v376 = vunpack.c.l.b16 %v294
      %v377 = vunpack.c.l.b16 %v295
      %v378 = vunpack.c.l.b16 %v296
      %v379 = vpack.c.b16 %v374, %v374
      %v380 = vpack.c.b16 %v375, %v375
      %v381 = vpack.c.b16 %v376, %v376
      %v382 = vpack.c.b16 %v377, %v377
      %v383 = vpack.c.b16 %v378, %v378
      %384 = vrot.lane.b32.xlu0 %v379, 16
      %v385 = vpop.permute.xlu0 %384
      %386 = vrot.lane.b32.xlu0 %v380, 16
      %v387 = vpop.permute.xlu0 %386
      %388 = vrot.lane.b32.xlu0 %v381, 16
      %v389 = vpop.permute.xlu0 %388
      %390 = vrot.lane.b32.xlu0 %v382, 16
      %v391 = vpop.permute.xlu0 %390
      %392 = vrot.lane.b32.xlu0 %v383, 16
      %v393 = vpop.permute.xlu0 %392
      %v395 = vshrl.u32 %v379, 16
      %v397 = vshll.u32 %v379, 16
      %v399 = vrot.slane %v397, 1
      %v400 = vor.u32 %v395, %v399
      %v402 = vshrl.u32 %v380, 16
      %v404 = vshll.u32 %v380, 16
      %v406 = vrot.slane %v404, 1
      %v407 = vor.u32 %v402, %v406
      %v409 = vshrl.u32 %v381, 16
      %v411 = vshll.u32 %v381, 16
      %v413 = vrot.slane %v411, 1
      %v414 = vor.u32 %v409, %v413
      %v416 = vshrl.u32 %v382, 16
      %v418 = vshll.u32 %v382, 16
      %v420 = vrot.slane %v418, 1
      %v421 = vor.u32 %v416, %v420
      %v423 = vshrl.u32 %v383, 16
      %v425 = vshll.u32 %v383, 16
      %v427 = vrot.slane %v425, 1
      %v428 = vor.u32 %v423, %v427
      %429 = vrot.lane.b32.xlu0 %v400, 24
      %v430 = vpop.permute.xlu0 %429
      %431 = vrot.lane.b32.xlu0 %v407, 24
      %v432 = vpop.permute.xlu0 %431
      %433 = vrot.lane.b32.xlu0 %v414, 24
      %v434 = vpop.permute.xlu0 %433
      %435 = vrot.lane.b32.xlu0 %v421, 24
      %v436 = vpop.permute.xlu0 %435
      %437 = vrot.lane.b32.xlu0 %v428, 24
      %v438 = vpop.permute.xlu0 %437
      %v444 = vunpack.c.l.b16 %v298
      %v445 = vunpack.c.l.b16 %v299
      %v446 = vunpack.c.l.b16 %v300
      %v447 = vunpack.c.l.b16 %v301
      %v448 = vunpack.c.l.b16 %v302
      %v449 = vpack.c.b16 %v444, %v444
      %v450 = vpack.c.b16 %v445, %v445
      %v451 = vpack.c.b16 %v446, %v446
      %v452 = vpack.c.b16 %v447, %v447
      %v453 = vpack.c.b16 %v448, %v448
      %454 = vrot.lane.b32.xlu0 %v449, 32
      %v455 = vpop.permute.xlu0 %454
      %456 = vrot.lane.b32.xlu0 %v450, 32
      %v457 = vpop.permute.xlu0 %456
      %458 = vrot.lane.b32.xlu0 %v451, 32
      %v459 = vpop.permute.xlu0 %458
      %460 = vrot.lane.b32.xlu0 %v452, 32
      %v461 = vpop.permute.xlu0 %460
      %462 = vrot.lane.b32.xlu0 %v453, 32
      %v463 = vpop.permute.xlu0 %462
      %v465 = vshrl.u32 %v449, 16
      %v467 = vshll.u32 %v449, 16
      %v469 = vrot.slane %v467, 1
      %v470 = vor.u32 %v465, %v469
      %v472 = vshrl.u32 %v450, 16
      %v474 = vshll.u32 %v450, 16
      %v476 = vrot.slane %v474, 1
      %v477 = vor.u32 %v472, %v476
      %v479 = vshrl.u32 %v451, 16
      %v481 = vshll.u32 %v451, 16
      %v483 = vrot.slane %v481, 1
      %v484 = vor.u32 %v479, %v483
      %v486 = vshrl.u32 %v452, 16
      %v488 = vshll.u32 %v452, 16
      %v490 = vrot.slane %v488, 1
      %v491 = vor.u32 %v486, %v490
      %v493 = vshrl.u32 %v453, 16
      %v495 = vshll.u32 %v453, 16
      %v497 = vrot.slane %v495, 1
      %v498 = vor.u32 %v493, %v497
      %499 = vrot.lane.b32.xlu0 %v470, 40
      %v500 = vpop.permute.xlu0 %499
      %501 = vrot.lane.b32.xlu0 %v477, 40
      %v502 = vpop.permute.xlu0 %501
      %503 = vrot.lane.b32.xlu0 %v484, 40
      %v504 = vpop.permute.xlu0 %503
      %505 = vrot.lane.b32.xlu0 %v491, 40
      %v506 = vpop.permute.xlu0 %505
      %507 = vrot.lane.b32.xlu0 %v498, 40
      %v508 = vpop.permute.xlu0 %507
      %v514 = vunpack.c.l.b16 %v304
      %v515 = vunpack.c.l.b16 %v305
      %v516 = vunpack.c.l.b16 %v306
      %v517 = vunpack.c.l.b16 %v307
      %v518 = vunpack.c.l.b16 %v308
      %v519 = vpack.c.b16 %v514, %v514
      %v520 = vpack.c.b16 %v515, %v515
      %v521 = vpack.c.b16 %v516, %v516
      %v522 = vpack.c.b16 %v517, %v517
      %v523 = vpack.c.b16 %v518, %v518
      %524 = vrot.lane.b32.xlu0 %v519, 48
      %v525 = vpop.permute.xlu0 %524
      %526 = vrot.lane.b32.xlu0 %v520, 48
      %v527 = vpop.permute.xlu0 %526
      %528 = vrot.lane.b32.xlu0 %v521, 48
      %v529 = vpop.permute.xlu0 %528
      %530 = vrot.lane.b32.xlu0 %v522, 48
      %v531 = vpop.permute.xlu0 %530
      %532 = vrot.lane.b32.xlu0 %v523, 48
      %v533 = vpop.permute.xlu0 %532
      %v535 = vshrl.u32 %v519, 16
      %v537 = vshll.u32 %v519, 16
      %v539 = vrot.slane %v537, 1
      %v540 = vor.u32 %v535, %v539
      %v542 = vshrl.u32 %v520, 16
      %v544 = vshll.u32 %v520, 16
      %v546 = vrot.slane %v544, 1
      %v547 = vor.u32 %v542, %v546
      %v549 = vshrl.u32 %v521, 16
      %v551 = vshll.u32 %v521, 16
      %v553 = vrot.slane %v551, 1
      %v554 = vor.u32 %v549, %v553
      %v556 = vshrl.u32 %v522, 16
      %v558 = vshll.u32 %v522, 16
      %v560 = vrot.slane %v558, 1
      %v561 = vor.u32 %v556, %v560
      %v563 = vshrl.u32 %v523, 16
      %v565 = vshll.u32 %v523, 16
      %v567 = vrot.slane %v565, 1
      %v568 = vor.u32 %v563, %v567
      %569 = vrot.lane.b32.xlu0 %v540, 56
      %v570 = vpop.permute.xlu0 %569
      %571 = vrot.lane.b32.xlu0 %v547, 56
      %v572 = vpop.permute.xlu0 %571
      %573 = vrot.lane.b32.xlu0 %v554, 56
      %v574 = vpop.permute.xlu0 %573
      %575 = vrot.lane.b32.xlu0 %v561, 56
      %v576 = vpop.permute.xlu0 %575
      %577 = vrot.lane.b32.xlu0 %v568, 56
      %v578 = vpop.permute.xlu0 %577
      %vm579 = vcmask 64512
      %v582 = vsel %vm579, %v286, %v360
      %v585 = vsel %vm579, %v287, %v362
      %v588 = vsel %vm579, %v288, %v364
      %v591 = vsel %vm579, %v289, %v366
      %v594 = vsel %vm579, %v290, %v368
      %vm595 = vcmask 130048
      %v597 = vsel %vm595, %v582, %v385
      %v599 = vsel %vm595, %v585, %v387
      %v601 = vsel %vm595, %v588, %v389
      %v603 = vsel %vm595, %v591, %v391
      %v605 = vsel %vm595, %v594, %v393
      %vm606 = vcmask 195584
      %v608 = vsel %vm606, %v597, %v430
      %v610 = vsel %vm606, %v599, %v432
      %v612 = vsel %vm606, %v601, %v434
      %v614 = vsel %vm606, %v603, %v436
      %v616 = vsel %vm606, %v605, %v438
      %vm617 = vcmask 261120
      %v619 = vsel %vm617, %v608, %v455
      %v621 = vsel %vm617, %v610, %v457
      %v623 = vsel %vm617, %v612, %v459
      %v625 = vsel %vm617, %v614, %v461
      %v627 = vsel %vm617, %v616, %v463
      %vm628 = vcmask 326656
      %v630 = vsel %vm628, %v619, %v500
      %v632 = vsel %vm628, %v621, %v502
      %v634 = vsel %vm628, %v623, %v504
      %v636 = vsel %vm628, %v625, %v506
      %v638 = vsel %vm628, %v627, %v508
      %vm639 = vcmask 392192
      %v641 = vsel %vm639, %v630, %v525
      %v643 = vsel %vm639, %v632, %v527
      %v645 = vsel %vm639, %v634, %v529
      %v647 = vsel %vm639, %v636, %v531
      %v649 = vsel %vm639, %v638, %v533
      %vm650 = vcmask 457728
      %v652 = vsel %vm650, %v641, %v570
      %v654 = vsel %vm650, %v643, %v572
      %v656 = vsel %vm650, %v645, %v574
      %v658 = vsel %vm650, %v647, %v576
      %v660 = vsel %vm650, %v649, %v578
      %v667 = vunpack.c.l.s4 1966171168
      %v668 = vunpack.c.0.s8 %v667
      %v669 = vlaneseq
      %v670 = vshrl.u32 %v669, 7
      %v671 = vsub.s32 %v668, %v670
      %v672 = vrot.slane %v652, %v671
      %v673 = vcombine.high %v672, %v672
      %v675 = vunpack.c.l.s4 1966171168
      %v676 = vunpack.c.0.s8 %v675
      %v677 = vlaneseq
      %v678 = vshrl.u32 %v677, 7
      %v679 = vsub.s32 %v676, %v678
      %v680 = vrot.slane %v672, %v679
      %v682 = vunpack.c.l.s4 1966171168
      %v683 = vunpack.c.0.s8 %v682
      %v684 = vlaneseq
      %v685 = vshrl.u32 %v684, 7
      %v686 = vsub.s32 %v683, %v685
      %v687 = vrot.slane %v673, %v686
      %v688 = vcombine.high %v680, %v680
      %v690 = vunpack.c.l.s4 1966171168
      %v691 = vunpack.c.0.s8 %v690
      %v692 = vlaneseq
      %v693 = vshrl.u32 %v692, 7
      %v694 = vsub.s32 %v691, %v693
      %v695 = vrot.slane %v654, %v694
      %v696 = vcombine.high %v695, %v695
      %v698 = vunpack.c.l.s4 1966171168
      %v699 = vunpack.c.0.s8 %v698
      %v700 = vlaneseq
      %v701 = vshrl.u32 %v700, 7
      %v702 = vsub.s32 %v699, %v701
      %v703 = vrot.slane %v695, %v702
      %v705 = vunpack.c.l.s4 1966171168
      %v706 = vunpack.c.0.s8 %v705
      %v707 = vlaneseq
      %v708 = vshrl.u32 %v707, 7
      %v709 = vsub.s32 %v706, %v708
      %v710 = vrot.slane %v696, %v709
      %v711 = vcombine.high %v703, %v703
      %v713 = vunpack.c.l.s4 1966171168
      %v714 = vunpack.c.0.s8 %v713
      %v715 = vlaneseq
      %v716 = vshrl.u32 %v715, 7
      %v717 = vsub.s32 %v714, %v716
      %v718 = vrot.slane %v656, %v717
      %v719 = vcombine.high %v718, %v718
      %v721 = vunpack.c.l.s4 1966171168
      %v722 = vunpack.c.0.s8 %v721
      %v723 = vlaneseq
      %v724 = vshrl.u32 %v723, 7
      %v725 = vsub.s32 %v722, %v724
      %v726 = vrot.slane %v718, %v725
      %v728 = vunpack.c.l.s4 1966171168
      %v729 = vunpack.c.0.s8 %v728
      %v730 = vlaneseq
      %v731 = vshrl.u32 %v730, 7
      %v732 = vsub.s32 %v729, %v731
      %v733 = vrot.slane %v719, %v732
      %v734 = vcombine.high %v726, %v726
      %v736 = vunpack.c.l.s4 1966171168
      %v737 = vunpack.c.0.s8 %v736
      %v738 = vlaneseq
      %v739 = vshrl.u32 %v738, 7
      %v740 = vsub.s32 %v737, %v739
      %v741 = vrot.slane %v658, %v740
      %v742 = vcombine.high %v741, %v741
      %v744 = vunpack.c.l.s4 1966171168
      %v745 = vunpack.c.0.s8 %v744
      %v746 = vlaneseq
      %v747 = vshrl.u32 %v746, 7
      %v748 = vsub.s32 %v745, %v747
      %v749 = vrot.slane %v741, %v748
      %v751 = vunpack.c.l.s4 1966171168
      %v752 = vunpack.c.0.s8 %v751
      %v753 = vlaneseq
      %v754 = vshrl.u32 %v753, 7
      %v755 = vsub.s32 %v752, %v754
      %v756 = vrot.slane %v742, %v755
      %v757 = vcombine.high %v749, %v749
      %v759 = vunpack.c.l.s4 1966171168
      %v760 = vunpack.c.0.s8 %v759
      %v761 = vlaneseq
      %v762 = vshrl.u32 %v761, 7
      %v763 = vsub.s32 %v760, %v762
      %v764 = vrot.slane %v660, %v763
      %v765 = vcombine.high %v764, %v764
      %v767 = vunpack.c.l.s4 1966171168
      %v768 = vunpack.c.0.s8 %v767
      %v769 = vlaneseq
      %v770 = vshrl.u32 %v769, 7
      %v771 = vsub.s32 %v768, %v770
      %v772 = vrot.slane %v764, %v771
      %v774 = vunpack.c.l.s4 1966171168
      %v775 = vunpack.c.0.s8 %v774
      %v776 = vlaneseq
      %v777 = vshrl.u32 %v776, 7
      %v778 = vsub.s32 %v775, %v777
      %v779 = vrot.slane %v765, %v778
      %v780 = vcombine.high %v772, %v772
      %v781 = vunpack.i.l.s16 %v680
      %v782 = vunpack.i.h.s16 %v680
      %v783 = vunpack.i.l.s16 %v687
      %v784 = vunpack.i.h.s16 %v687
      %v785 = vunpack.i.l.s16 %v688
      %v786 = vunpack.i.l.s16 %v703
      %v787 = vunpack.i.h.s16 %v703
      %v788 = vunpack.i.l.s16 %v710
      %v789 = vunpack.i.h.s16 %v710
      %v790 = vunpack.i.l.s16 %v711
      %v791 = vunpack.i.l.s16 %v726
      %v792 = vunpack.i.h.s16 %v726
      %v793 = vunpack.i.l.s16 %v733
      %v794 = vunpack.i.h.s16 %v733
      %v795 = vunpack.i.l.s16 %v734
      %v796 = vunpack.i.l.s16 %v749
      %v797 = vunpack.i.h.s16 %v749
      %v798 = vunpack.i.l.s16 %v756
      %v799 = vunpack.i.h.s16 %v756
      %v800 = vunpack.i.l.s16 %v757
      %v801 = vunpack.i.l.s16 %v772
      %v802 = vunpack.i.h.s16 %v772
      %v803 = vunpack.i.l.s16 %v779
      %v804 = vunpack.i.h.s16 %v779
      %v805 = vunpack.i.l.s16 %v780
      %s806 = scalar_lea.vmem %s256, 48
      %v807 = vld [vmem:[%s806] sm:$0x7]
      %v808 = vld [vmem:[%s806 + $0x4] sm:$0x7]
      %v809 = vld [vmem:[%s806 + $0x8] sm:$0x7]
      %v810 = vld [vmem:[%s806 + $0xc] sm:$0x7]
      %v811 = vld [vmem:[%s806 + $0x10] sm:$0x7]
      %s812 = scalar_lea.vmem %s256, 52
      %v813 = vld [vmem:[%s812] sm:$0x7]
      %v814 = vld [vmem:[%s812 + $0x4] sm:$0x7]
      %v815 = vld [vmem:[%s812 + $0x8] sm:$0x7]
      %v816 = vld [vmem:[%s812 + $0xc] sm:$0x7]
      %v817 = vld [vmem:[%s812 + $0x10] sm:$0x7]
      %818 = vrot.lane.b32.xlu0 %v470, 8
      %v819 = vpop.permute.xlu0 %818
      %820 = vrot.lane.b32.xlu0 %v477, 8
      %v821 = vpop.permute.xlu0 %820
      %822 = vrot.lane.b32.xlu0 %v484, 8
      %v823 = vpop.permute.xlu0 %822
      %824 = vrot.lane.b32.xlu0 %v491, 8
      %v825 = vpop.permute.xlu0 %824
      %826 = vrot.lane.b32.xlu0 %v498, 8
      %v827 = vpop.permute.xlu0 %826
      %828 = vrot.lane.b32.xlu0 %v519, 16
      %v829 = vpop.permute.xlu0 %828
      %830 = vrot.lane.b32.xlu0 %v520, 16
      %v831 = vpop.permute.xlu0 %830
      %832 = vrot.lane.b32.xlu0 %v521, 16
      %v833 = vpop.permute.xlu0 %832
      %834 = vrot.lane.b32.xlu0 %v522, 16
      %v835 = vpop.permute.xlu0 %834
      %836 = vrot.lane.b32.xlu0 %v523, 16
      %v837 = vpop.permute.xlu0 %836
      %838 = vrot.lane.b32.xlu0 %v540, 24
      %v839 = vpop.permute.xlu0 %838
      %840 = vrot.lane.b32.xlu0 %v547, 24
      %v841 = vpop.permute.xlu0 %840
      %842 = vrot.lane.b32.xlu0 %v554, 24
      %v843 = vpop.permute.xlu0 %842
      %844 = vrot.lane.b32.xlu0 %v561, 24
      %v845 = vpop.permute.xlu0 %844
      %846 = vrot.lane.b32.xlu0 %v568, 24
      %v847 = vpop.permute.xlu0 %846
      %v853 = vunpack.c.l.b16 %v807
      %v854 = vunpack.c.l.b16 %v808
      %v855 = vunpack.c.l.b16 %v809
      %v856 = vunpack.c.l.b16 %v810
      %v857 = vunpack.c.l.b16 %v811
      %v858 = vpack.c.b16 %v853, %v853
      %v859 = vpack.c.b16 %v854, %v854
      %v860 = vpack.c.b16 %v855, %v855
      %v861 = vpack.c.b16 %v856, %v856
      %v862 = vpack.c.b16 %v857, %v857
      %863 = vrot.lane.b32.xlu0 %v858, 32
      %v864 = vpop.permute.xlu0 %863
      %865 = vrot.lane.b32.xlu0 %v859, 32
      %v866 = vpop.permute.xlu0 %865
      %867 = vrot.lane.b32.xlu0 %v860, 32
      %v868 = vpop.permute.xlu0 %867
      %869 = vrot.lane.b32.xlu0 %v861, 32
      %v870 = vpop.permute.xlu0 %869
      %871 = vrot.lane.b32.xlu0 %v862, 32
      %v872 = vpop.permute.xlu0 %871
      %v874 = vshrl.u32 %v858, 16
      %v876 = vshll.u32 %v858, 16
      %v878 = vrot.slane %v876, 1
      %v879 = vor.u32 %v874, %v878
      %v881 = vshrl.u32 %v859, 16
      %v883 = vshll.u32 %v859, 16
      %v885 = vrot.slane %v883, 1
      %v886 = vor.u32 %v881, %v885
      %v888 = vshrl.u32 %v860, 16
      %v890 = vshll.u32 %v860, 16
      %v892 = vrot.slane %v890, 1
      %v893 = vor.u32 %v888, %v892
      %v895 = vshrl.u32 %v861, 16
      %v897 = vshll.u32 %v861, 16
      %v899 = vrot.slane %v897, 1
      %v900 = vor.u32 %v895, %v899
      %v902 = vshrl.u32 %v862, 16
      %v904 = vshll.u32 %v862, 16
      %v906 = vrot.slane %v904, 1
      %v907 = vor.u32 %v902, %v906
      %908 = vrot.lane.b32.xlu0 %v879, 40
      %v909 = vpop.permute.xlu0 %908
      %910 = vrot.lane.b32.xlu0 %v886, 40
      %v911 = vpop.permute.xlu0 %910
      %912 = vrot.lane.b32.xlu0 %v893, 40
      %v913 = vpop.permute.xlu0 %912
      %914 = vrot.lane.b32.xlu0 %v900, 40
      %v915 = vpop.permute.xlu0 %914
      %916 = vrot.lane.b32.xlu0 %v907, 40
      %v917 = vpop.permute.xlu0 %916
      %v923 = vunpack.c.l.b16 %v813
      %v924 = vunpack.c.l.b16 %v814
      %v925 = vunpack.c.l.b16 %v815
      %v926 = vunpack.c.l.b16 %v816
      %v927 = vunpack.c.l.b16 %v817
      %v928 = vpack.c.b16 %v923, %v923
      %v929 = vpack.c.b16 %v924, %v924
      %v930 = vpack.c.b16 %v925, %v925
      %v931 = vpack.c.b16 %v926, %v926
      %v932 = vpack.c.b16 %v927, %v927
      %933 = vrot.lane.b32.xlu0 %v928, 48
      %v934 = vpop.permute.xlu0 %933
      %935 = vrot.lane.b32.xlu0 %v929, 48
      %v936 = vpop.permute.xlu0 %935
      %937 = vrot.lane.b32.xlu0 %v930, 48
      %v938 = vpop.permute.xlu0 %937
      %939 = vrot.lane.b32.xlu0 %v931, 48
      %v940 = vpop.permute.xlu0 %939
      %941 = vrot.lane.b32.xlu0 %v932, 48
      %v942 = vpop.permute.xlu0 %941
      %v944 = vshrl.u32 %v928, 16
      %v946 = vshll.u32 %v928, 16
      %v948 = vrot.slane %v946, 1
      %v949 = vor.u32 %v944, %v948
      %v951 = vshrl.u32 %v929, 16
      %v953 = vshll.u32 %v929, 16
      %v955 = vrot.slane %v953, 1
      %v956 = vor.u32 %v951, %v955
      %v958 = vshrl.u32 %v930, 16
      %v960 = vshll.u32 %v930, 16
      %v962 = vrot.slane %v960, 1
      %v963 = vor.u32 %v958, %v962
      %v965 = vshrl.u32 %v931, 16
      %v967 = vshll.u32 %v931, 16
      %v969 = vrot.slane %v967, 1
      %v970 = vor.u32 %v965, %v969
      %v972 = vshrl.u32 %v932, 16
      %v974 = vshll.u32 %v932, 16
      %v976 = vrot.slane %v974, 1
      %v977 = vor.u32 %v972, %v976
      %978 = vrot.lane.b32.xlu0 %v949, 56
      %v979 = vpop.permute.xlu0 %978
      %980 = vrot.lane.b32.xlu0 %v956, 56
      %v981 = vpop.permute.xlu0 %980
      %982 = vrot.lane.b32.xlu0 %v963, 56
      %v983 = vpop.permute.xlu0 %982
      %984 = vrot.lane.b32.xlu0 %v970, 56
      %v985 = vpop.permute.xlu0 %984
      %986 = vrot.lane.b32.xlu0 %v977, 56
      %v987 = vpop.permute.xlu0 %986
      %v990 = vsel %vm579, %v298, %v819
      %v993 = vsel %vm579, %v299, %v821
      %v996 = vsel %vm579, %v300, %v823
      %v999 = vsel %vm579, %v301, %v825
      %v1002 = vsel %vm579, %v302, %v827
      %v1004 = vsel %vm595, %v990, %v829
      %v1006 = vsel %vm595, %v993, %v831
      %v1008 = vsel %vm595, %v996, %v833
      %v1010 = vsel %vm595, %v999, %v835
      %v1012 = vsel %vm595, %v1002, %v837
      %v1014 = vsel %vm606, %v1004, %v839
      %v1016 = vsel %vm606, %v1006, %v841
      %v1018 = vsel %vm606, %v1008, %v843
      %v1020 = vsel %vm606, %v1010, %v845
      %v1022 = vsel %vm606, %v1012, %v847
      %v1024 = vsel %vm617, %v1014, %v864
      %v1026 = vsel %vm617, %v1016, %v866
      %v1028 = vsel %vm617, %v1018, %v868
      %v1030 = vsel %vm617, %v1020, %v870
      %v1032 = vsel %vm617, %v1022, %v872
      %v1034 = vsel %vm628, %v1024, %v909
      %v1036 = vsel %vm628, %v1026, %v911
      %v1038 = vsel %vm628, %v1028, %v913
      %v1040 = vsel %vm628, %v1030, %v915
      %v1042 = vsel %vm628, %v1032, %v917
      %v1044 = vsel %vm639, %v1034, %v934
      %v1046 = vsel %vm639, %v1036, %v936
      %v1048 = vsel %vm639, %v1038, %v938
      %v1050 = vsel %vm639, %v1040, %v940
      %v1052 = vsel %vm639, %v1042, %v942
      %v1054 = vsel %vm650, %v1044, %v979
      %v1056 = vsel %vm650, %v1046, %v981
      %v1058 = vsel %vm650, %v1048, %v983
      %v1060 = vsel %vm650, %v1050, %v985
      %v1062 = vsel %vm650, %v1052, %v987
      %v1069 = vunpack.c.l.s4 1966171168
      %v1070 = vunpack.c.0.s8 %v1069
      %v1071 = vlaneseq
      %v1072 = vshrl.u32 %v1071, 7
      %v1073 = vsub.s32 %v1070, %v1072
      %v1074 = vrot.slane %v1054, %v1073
      %v1075 = vcombine.high %v1074, %v1074
      %v1077 = vunpack.c.l.s4 1966171168
      %v1078 = vunpack.c.0.s8 %v1077
      %v1079 = vlaneseq
      %v1080 = vshrl.u32 %v1079, 7
      %v1081 = vsub.s32 %v1078, %v1080
      %v1082 = vrot.slane %v1074, %v1081
      %v1084 = vunpack.c.l.s4 1966171168
      %v1085 = vunpack.c.0.s8 %v1084
      %v1086 = vlaneseq
      %v1087 = vshrl.u32 %v1086, 7
      %v1088 = vsub.s32 %v1085, %v1087
      %v1089 = vrot.slane %v1075, %v1088
      %v1090 = vcombine.high %v1082, %v1082
      %v1092 = vunpack.c.l.s4 1966171168
      %v1093 = vunpack.c.0.s8 %v1092
      %v1094 = vlaneseq
      %v1095 = vshrl.u32 %v1094, 7
      %v1096 = vsub.s32 %v1093, %v1095
      %v1097 = vrot.slane %v1056, %v1096
      %v1098 = vcombine.high %v1097, %v1097
      %v1100 = vunpack.c.l.s4 1966171168
      %v1101 = vunpack.c.0.s8 %v1100
      %v1102 = vlaneseq
      %v1103 = vshrl.u32 %v1102, 7
      %v1104 = vsub.s32 %v1101, %v1103
      %v1105 = vrot.slane %v1097, %v1104
      %v1107 = vunpack.c.l.s4 1966171168
      %v1108 = vunpack.c.0.s8 %v1107
      %v1109 = vlaneseq
      %v1110 = vshrl.u32 %v1109, 7
      %v1111 = vsub.s32 %v1108, %v1110
      %v1112 = vrot.slane %v1098, %v1111
      %v1113 = vcombine.high %v1105, %v1105
      %v1115 = vunpack.c.l.s4 1966171168
      %v1116 = vunpack.c.0.s8 %v1115
      %v1117 = vlaneseq
      %v1118 = vshrl.u32 %v1117, 7
      %v1119 = vsub.s32 %v1116, %v1118
      %v1120 = vrot.slane %v1058, %v1119
      %v1121 = vcombine.high %v1120, %v1120
      %v1123 = vunpack.c.l.s4 1966171168
      %v1124 = vunpack.c.0.s8 %v1123
      %v1125 = vlaneseq
      %v1126 = vshrl.u32 %v1125, 7
      %v1127 = vsub.s32 %v1124, %v1126
      %v1128 = vrot.slane %v1120, %v1127
      %v1130 = vunpack.c.l.s4 1966171168
      %v1131 = vunpack.c.0.s8 %v1130
      %v1132 = vlaneseq
      %v1133 = vshrl.u32 %v1132, 7
      %v1134 = vsub.s32 %v1131, %v1133
      %v1135 = vrot.slane %v1121, %v1134
      %v1136 = vcombine.high %v1128, %v1128
      %v1138 = vunpack.c.l.s4 1966171168
      %v1139 = vunpack.c.0.s8 %v1138
      %v1140 = vlaneseq
      %v1141 = vshrl.u32 %v1140, 7
      %v1142 = vsub.s32 %v1139, %v1141
      %v1143 = vrot.slane %v1060, %v1142
      %v1144 = vcombine.high %v1143, %v1143
      %v1146 = vunpack.c.l.s4 1966171168
      %v1147 = vunpack.c.0.s8 %v1146
      %v1148 = vlaneseq
      %v1149 = vshrl.u32 %v1148, 7
      %v1150 = vsub.s32 %v1147, %v1149
      %v1151 = vrot.slane %v1143, %v1150
      %v1153 = vunpack.c.l.s4 1966171168
      %v1154 = vunpack.c.0.s8 %v1153
      %v1155 = vlaneseq
      %v1156 = vshrl.u32 %v1155, 7
      %v1157 = vsub.s32 %v1154, %v1156
      %v1158 = vrot.slane %v1144, %v1157
      %v1159 = vcombine.high %v1151, %v1151
      %v1161 = vunpack.c.l.s4 1966171168
      %v1162 = vunpack.c.0.s8 %v1161
      %v1163 = vlaneseq
      %v1164 = vshrl.u32 %v1163, 7
      %v1165 = vsub.s32 %v1162, %v1164
      %v1166 = vrot.slane %v1062, %v1165
      %v1167 = vcombine.high %v1166, %v1166
      %v1169 = vunpack.c.l.s4 1966171168
      %v1170 = vunpack.c.0.s8 %v1169
      %v1171 = vlaneseq
      %v1172 = vshrl.u32 %v1171, 7
      %v1173 = vsub.s32 %v1170, %v1172
      %v1174 = vrot.slane %v1166, %v1173
      %v1176 = vunpack.c.l.s4 1966171168
      %v1177 = vunpack.c.0.s8 %v1176
      %v1178 = vlaneseq
      %v1179 = vshrl.u32 %v1178, 7
      %v1180 = vsub.s32 %v1177, %v1179
      %v1181 = vrot.slane %v1167, %v1180
      %v1182 = vcombine.high %v1174, %v1174
      %v1183 = vunpack.i.l.s16 %v1082
      %v1184 = vunpack.i.h.s16 %v1082
      %v1185 = vunpack.i.l.s16 %v1089
      %v1186 = vunpack.i.h.s16 %v1089
      %v1187 = vunpack.i.l.s16 %v1090
      %v1188 = vunpack.i.l.s16 %v1105
      %v1189 = vunpack.i.h.s16 %v1105
      %v1190 = vunpack.i.l.s16 %v1112
      %v1191 = vunpack.i.h.s16 %v1112
      %v1192 = vunpack.i.l.s16 %v1113
      %v1193 = vunpack.i.l.s16 %v1128
      %v1194 = vunpack.i.h.s16 %v1128
      %v1195 = vunpack.i.l.s16 %v1135
      %v1196 = vunpack.i.h.s16 %v1135
      %v1197 = vunpack.i.l.s16 %v1136
      %v1198 = vunpack.i.l.s16 %v1151
      %v1199 = vunpack.i.h.s16 %v1151
      %v1200 = vunpack.i.l.s16 %v1158
      %v1201 = vunpack.i.h.s16 %v1158
      %v1202 = vunpack.i.l.s16 %v1159
      %v1203 = vunpack.i.l.s16 %v1174
      %v1204 = vunpack.i.h.s16 %v1174
      %v1205 = vunpack.i.l.s16 %v1181
      %v1206 = vunpack.i.h.s16 %v1181
      %v1207 = vunpack.i.l.s16 %v1182
      %s1208 = scalar_lea.vmem %s256, 72
      %v1209 = vld [vmem:[%s1208] sm:$0x7]
      %v1210 = vld [vmem:[%s1208 + $0x4] sm:$0x7]
      %v1211 = vld [vmem:[%s1208 + $0x8] sm:$0x7]
      %v1212 = vld [vmem:[%s1208 + $0xc] sm:$0x7]
      %v1213 = vld [vmem:[%s1208 + $0x10] sm:$0x7]
      %s1214 = scalar_lea.vmem %s256, 76
      %v1215 = vld [vmem:[%s1214] sm:$0x7]
      %v1216 = vld [vmem:[%s1214 + $0x4] sm:$0x7]
      %v1217 = vld [vmem:[%s1214 + $0x8] sm:$0x7]
      %v1218 = vld [vmem:[%s1214 + $0xc] sm:$0x7]
      %v1219 = vld [vmem:[%s1214 + $0x10] sm:$0x7]
      %1220 = vrot.lane.b32.xlu0 %v879, 8
      %v1221 = vpop.permute.xlu0 %1220
      %1222 = vrot.lane.b32.xlu0 %v886, 8
      %v1223 = vpop.permute.xlu0 %1222
      %1224 = vrot.lane.b32.xlu0 %v893, 8
      %v1225 = vpop.permute.xlu0 %1224
      %1226 = vrot.lane.b32.xlu0 %v900, 8
      %v1227 = vpop.permute.xlu0 %1226
      %1228 = vrot.lane.b32.xlu0 %v907, 8
      %v1229 = vpop.permute.xlu0 %1228
      %1230 = vrot.lane.b32.xlu0 %v928, 16
      %v1231 = vpop.permute.xlu0 %1230
      %1232 = vrot.lane.b32.xlu0 %v929, 16
      %v1233 = vpop.permute.xlu0 %1232
      %1234 = vrot.lane.b32.xlu0 %v930, 16
      %v1235 = vpop.permute.xlu0 %1234
      %1236 = vrot.lane.b32.xlu0 %v931, 16
      %v1237 = vpop.permute.xlu0 %1236
      %1238 = vrot.lane.b32.xlu0 %v932, 16
      %v1239 = vpop.permute.xlu0 %1238
      %1240 = vrot.lane.b32.xlu0 %v949, 24
      %v1241 = vpop.permute.xlu0 %1240
      %1242 = vrot.lane.b32.xlu0 %v956, 24
      %v1243 = vpop.permute.xlu0 %1242
      %1244 = vrot.lane.b32.xlu0 %v963, 24
      %v1245 = vpop.permute.xlu0 %1244
      %1246 = vrot.lane.b32.xlu0 %v970, 24
      %v1247 = vpop.permute.xlu0 %1246
      %1248 = vrot.lane.b32.xlu0 %v977, 24
      %v1249 = vpop.permute.xlu0 %1248
      %v1255 = vunpack.c.l.b16 %v1209
      %v1256 = vunpack.c.l.b16 %v1210
      %v1257 = vunpack.c.l.b16 %v1211
      %v1258 = vunpack.c.l.b16 %v1212
      %v1259 = vunpack.c.l.b16 %v1213
      %v1260 = vpack.c.b16 %v1255, %v1255
      %v1261 = vpack.c.b16 %v1256, %v1256
      %v1262 = vpack.c.b16 %v1257, %v1257
      %v1263 = vpack.c.b16 %v1258, %v1258
      %v1264 = vpack.c.b16 %v1259, %v1259
      %1265 = vrot.lane.b32.xlu0 %v1260, 32
      %v1266 = vpop.permute.xlu0 %1265
      %1267 = vrot.lane.b32.xlu0 %v1261, 32
      %v1268 = vpop.permute.xlu0 %1267
      %1269 = vrot.lane.b32.xlu0 %v1262, 32
      %v1270 = vpop.permute.xlu0 %1269
      %1271 = vrot.lane.b32.xlu0 %v1263, 32
      %v1272 = vpop.permute.xlu0 %1271
      %1273 = vrot.lane.b32.xlu0 %v1264, 32
      %v1274 = vpop.permute.xlu0 %1273
      %v1276 = vshrl.u32 %v1260, 16
      %v1278 = vshll.u32 %v1260, 16
      %v1280 = vrot.slane %v1278, 1
      %v1281 = vor.u32 %v1276, %v1280
      %v1283 = vshrl.u32 %v1261, 16
      %v1285 = vshll.u32 %v1261, 16
      %v1287 = vrot.slane %v1285, 1
      %v1288 = vor.u32 %v1283, %v1287
      %v1290 = vshrl.u32 %v1262, 16
      %v1292 = vshll.u32 %v1262, 16
      %v1294 = vrot.slane %v1292, 1
      %v1295 = vor.u32 %v1290, %v1294
      %v1297 = vshrl.u32 %v1263, 16
      %v1299 = vshll.u32 %v1263, 16
      %v1301 = vrot.slane %v1299, 1
      %v1302 = vor.u32 %v1297, %v1301
      %v1304 = vshrl.u32 %v1264, 16
      %v1306 = vshll.u32 %v1264, 16
      %v1308 = vrot.slane %v1306, 1
      %v1309 = vor.u32 %v1304, %v1308
      %1310 = vrot.lane.b32.xlu0 %v1281, 40
      %v1311 = vpop.permute.xlu0 %1310
      %1312 = vrot.lane.b32.xlu0 %v1288, 40
      %v1313 = vpop.permute.xlu0 %1312
      %1314 = vrot.lane.b32.xlu0 %v1295, 40
      %v1315 = vpop.permute.xlu0 %1314
      %1316 = vrot.lane.b32.xlu0 %v1302, 40
      %v1317 = vpop.permute.xlu0 %1316
      %1318 = vrot.lane.b32.xlu0 %v1309, 40
      %v1319 = vpop.permute.xlu0 %1318
      %v1325 = vunpack.c.l.b16 %v1215
      %v1326 = vunpack.c.l.b16 %v1216
      %v1327 = vunpack.c.l.b16 %v1217
      %v1328 = vunpack.c.l.b16 %v1218
      %v1329 = vunpack.c.l.b16 %v1219
      %v1330 = vpack.c.b16 %v1325, %v1325
      %v1331 = vpack.c.b16 %v1326, %v1326
      %v1332 = vpack.c.b16 %v1327, %v1327
      %v1333 = vpack.c.b16 %v1328, %v1328
      %v1334 = vpack.c.b16 %v1329, %v1329
      %1335 = vrot.lane.b32.xlu0 %v1330, 48
      %v1336 = vpop.permute.xlu0 %1335
      %1337 = vrot.lane.b32.xlu0 %v1331, 48
      %v1338 = vpop.permute.xlu0 %1337
      %1339 = vrot.lane.b32.xlu0 %v1332, 48
      %v1340 = vpop.permute.xlu0 %1339
      %1341 = vrot.lane.b32.xlu0 %v1333, 48
      %v1342 = vpop.permute.xlu0 %1341
      %1343 = vrot.lane.b32.xlu0 %v1334, 48
      %v1344 = vpop.permute.xlu0 %1343
      %v1346 = vshrl.u32 %v1330, 16
      %v1348 = vshll.u32 %v1330, 16
      %v1350 = vrot.slane %v1348, 1
      %v1351 = vor.u32 %v1346, %v1350
      %v1353 = vshrl.u32 %v1331, 16
      %v1355 = vshll.u32 %v1331, 16
      %v1357 = vrot.slane %v1355, 1
      %v1358 = vor.u32 %v1353, %v1357
      %v1360 = vshrl.u32 %v1332, 16
      %v1362 = vshll.u32 %v1332, 16
      %v1364 = vrot.slane %v1362, 1
      %v1365 = vor.u32 %v1360, %v1364
      %v1367 = vshrl.u32 %v1333, 16
      %v1369 = vshll.u32 %v1333, 16
      %v1371 = vrot.slane %v1369, 1
      %v1372 = vor.u32 %v1367, %v1371
      %v1374 = vshrl.u32 %v1334, 16
      %v1376 = vshll.u32 %v1334, 16
      %v1378 = vrot.slane %v1376, 1
      %v1379 = vor.u32 %v1374, %v1378
      %1380 = vrot.lane.b32.xlu0 %v1351, 56
      %v1381 = vpop.permute.xlu0 %1380
      %1382 = vrot.lane.b32.xlu0 %v1358, 56
      %v1383 = vpop.permute.xlu0 %1382
      %1384 = vrot.lane.b32.xlu0 %v1365, 56
      %v1385 = vpop.permute.xlu0 %1384
      %1386 = vrot.lane.b32.xlu0 %v1372, 56
      %v1387 = vpop.permute.xlu0 %1386
      %1388 = vrot.lane.b32.xlu0 %v1379, 56
      %v1389 = vpop.permute.xlu0 %1388
      %v1392 = vsel %vm579, %v807, %v1221
      %v1395 = vsel %vm579, %v808, %v1223
      %v1398 = vsel %vm579, %v809, %v1225
      %v1401 = vsel %vm579, %v810, %v1227
      %v1404 = vsel %vm579, %v811, %v1229
      %v1406 = vsel %vm595, %v1392, %v1231
      %v1408 = vsel %vm595, %v1395, %v1233
      %v1410 = vsel %vm595, %v1398, %v1235
      %v1412 = vsel %vm595, %v1401, %v1237
      %v1414 = vsel %vm595, %v1404, %v1239
      %v1416 = vsel %vm606, %v1406, %v1241
      %v1418 = vsel %vm606, %v1408, %v1243
      %v1420 = vsel %vm606, %v1410, %v1245
      %v1422 = vsel %vm606, %v1412, %v1247
      %v1424 = vsel %vm606, %v1414, %v1249
      %v1426 = vsel %vm617, %v1416, %v1266
      %v1428 = vsel %vm617, %v1418, %v1268
      %v1430 = vsel %vm617, %v1420, %v1270
      %v1432 = vsel %vm617, %v1422, %v1272
      %v1434 = vsel %vm617, %v1424, %v1274
      %v1436 = vsel %vm628, %v1426, %v1311
      %v1438 = vsel %vm628, %v1428, %v1313
      %v1440 = vsel %vm628, %v1430, %v1315
      %v1442 = vsel %vm628, %v1432, %v1317
      %v1444 = vsel %vm628, %v1434, %v1319
      %v1446 = vsel %vm639, %v1436, %v1336
      %v1448 = vsel %vm639, %v1438, %v1338
      %v1450 = vsel %vm639, %v1440, %v1340
      %v1452 = vsel %vm639, %v1442, %v1342
      %v1454 = vsel %vm639, %v1444, %v1344
      %v1456 = vsel %vm650, %v1446, %v1381
      %v1458 = vsel %vm650, %v1448, %v1383
      %v1460 = vsel %vm650, %v1450, %v1385
      %v1462 = vsel %vm650, %v1452, %v1387
      %v1464 = vsel %vm650, %v1454, %v1389
      %v1471 = vunpack.c.l.s4 1966171168
      %v1472 = vunpack.c.0.s8 %v1471
      %v1473 = vlaneseq
      %v1474 = vshrl.u32 %v1473, 7
      %v1475 = vsub.s32 %v1472, %v1474
      %v1476 = vrot.slane %v1456, %v1475
      %v1477 = vcombine.high %v1476, %v1476
      %v1479 = vunpack.c.l.s4 1966171168
      %v1480 = vunpack.c.0.s8 %v1479
      %v1481 = vlaneseq
      %v1482 = vshrl.u32 %v1481, 7
      %v1483 = vsub.s32 %v1480, %v1482
      %v1484 = vrot.slane %v1476, %v1483
      %v1486 = vunpack.c.l.s4 1966171168
      %v1487 = vunpack.c.0.s8 %v1486
      %v1488 = vlaneseq
      %v1489 = vshrl.u32 %v1488, 7
      %v1490 = vsub.s32 %v1487, %v1489
      %v1491 = vrot.slane %v1477, %v1490
      %v1492 = vcombine.high %v1484, %v1484
      %v1494 = vunpack.c.l.s4 1966171168
      %v1495 = vunpack.c.0.s8 %v1494
      %v1496 = vlaneseq
      %v1497 = vshrl.u32 %v1496, 7
      %v1498 = vsub.s32 %v1495, %v1497
      %v1499 = vrot.slane %v1458, %v1498
      %v1500 = vcombine.high %v1499, %v1499
      %v1502 = vunpack.c.l.s4 1966171168
      %v1503 = vunpack.c.0.s8 %v1502
      %v1504 = vlaneseq
      %v1505 = vshrl.u32 %v1504, 7
      %v1506 = vsub.s32 %v1503, %v1505
      %v1507 = vrot.slane %v1499, %v1506
      %v1509 = vunpack.c.l.s4 1966171168
      %v1510 = vunpack.c.0.s8 %v1509
      %v1511 = vlaneseq
      %v1512 = vshrl.u32 %v1511, 7
      %v1513 = vsub.s32 %v1510, %v1512
      %v1514 = vrot.slane %v1500, %v1513
      %v1515 = vcombine.high %v1507, %v1507
      %v1517 = vunpack.c.l.s4 1966171168
      %v1518 = vunpack.c.0.s8 %v1517
      %v1519 = vlaneseq
      %v1520 = vshrl.u32 %v1519, 7
      %v1521 = vsub.s32 %v1518, %v1520
      %v1522 = vrot.slane %v1460, %v1521
      %v1523 = vcombine.high %v1522, %v1522
      %v1525 = vunpack.c.l.s4 1966171168
      %v1526 = vunpack.c.0.s8 %v1525
      %v1527 = vlaneseq
      %v1528 = vshrl.u32 %v1527, 7
      %v1529 = vsub.s32 %v1526, %v1528
      %v1530 = vrot.slane %v1522, %v1529
      %v1532 = vunpack.c.l.s4 1966171168
      %v1533 = vunpack.c.0.s8 %v1532
      %v1534 = vlaneseq
      %v1535 = vshrl.u32 %v1534, 7
      %v1536 = vsub.s32 %v1533, %v1535
      %v1537 = vrot.slane %v1523, %v1536
      %v1538 = vcombine.high %v1530, %v1530
      %v1540 = vunpack.c.l.s4 1966171168
      %v1541 = vunpack.c.0.s8 %v1540
      %v1542 = vlaneseq
      %v1543 = vshrl.u32 %v1542, 7
      %v1544 = vsub.s32 %v1541, %v1543
      %v1545 = vrot.slane %v1462, %v1544
      %v1546 = vcombine.high %v1545, %v1545
      %v1548 = vunpack.c.l.s4 1966171168
      %v1549 = vunpack.c.0.s8 %v1548
      %v1550 = vlaneseq
      %v1551 = vshrl.u32 %v1550, 7
      %v1552 = vsub.s32 %v1549, %v1551
      %v1553 = vrot.slane %v1545, %v1552
      %v1555 = vunpack.c.l.s4 1966171168
      %v1556 = vunpack.c.0.s8 %v1555
      %v1557 = vlaneseq
      %v1558 = vshrl.u32 %v1557, 7
      %v1559 = vsub.s32 %v1556, %v1558
      %v1560 = vrot.slane %v1546, %v1559
      %v1561 = vcombine.high %v1553, %v1553
      %v1563 = vunpack.c.l.s4 1966171168
      %v1564 = vunpack.c.0.s8 %v1563
      %v1565 = vlaneseq
      %v1566 = vshrl.u32 %v1565, 7
      %v1567 = vsub.s32 %v1564, %v1566
      %v1568 = vrot.slane %v1464, %v1567
      %v1569 = vcombine.high %v1568, %v1568
      %v1571 = vunpack.c.l.s4 1966171168
      %v1572 = vunpack.c.0.s8 %v1571
      %v1573 = vlaneseq
      %v1574 = vshrl.u32 %v1573, 7
      %v1575 = vsub.s32 %v1572, %v1574
      %v1576 = vrot.slane %v1568, %v1575
      %v1578 = vunpack.c.l.s4 1966171168
      %v1579 = vunpack.c.0.s8 %v1578
      %v1580 = vlaneseq
      %v1581 = vshrl.u32 %v1580, 7
      %v1582 = vsub.s32 %v1579, %v1581
      %v1583 = vrot.slane %v1569, %v1582
      %v1584 = vcombine.high %v1576, %v1576
      %v1585 = vunpack.i.l.s16 %v1484
      %v1586 = vunpack.i.h.s16 %v1484
      %v1587 = vunpack.i.l.s16 %v1491
      %v1588 = vunpack.i.h.s16 %v1491
      %v1589 = vunpack.i.l.s16 %v1492
      %v1590 = vunpack.i.l.s16 %v1507
      %v1591 = vunpack.i.h.s16 %v1507
      %v1592 = vunpack.i.l.s16 %v1514
      %v1593 = vunpack.i.h.s16 %v1514
      %v1594 = vunpack.i.l.s16 %v1515
      %v1595 = vunpack.i.l.s16 %v1530
      %v1596 = vunpack.i.h.s16 %v1530
      %v1597 = vunpack.i.l.s16 %v1537
      %v1598 = vunpack.i.h.s16 %v1537
      %v1599 = vunpack.i.l.s16 %v1538
      %v1600 = vunpack.i.l.s16 %v1553
      %v1601 = vunpack.i.h.s16 %v1553
      %v1602 = vunpack.i.l.s16 %v1560
      %v1603 = vunpack.i.h.s16 %v1560
      %v1604 = vunpack.i.l.s16 %v1561
      %v1605 = vunpack.i.l.s16 %v1576
      %v1606 = vunpack.i.h.s16 %v1576
      %v1607 = vunpack.i.l.s16 %v1583
      %v1608 = vunpack.i.h.s16 %v1583
      %v1609 = vunpack.i.l.s16 %v1584
      %s1610 = scalar_lea.vmem %s256, 96
      %v1611 = vld [vmem:[%s1610] sm:$0x7]
      %v1612 = vld [vmem:[%s1610 + $0x4] sm:$0x7]
      %v1613 = vld [vmem:[%s1610 + $0x8] sm:$0x7]
      %v1614 = vld [vmem:[%s1610 + $0xc] sm:$0x7]
      %v1615 = vld [vmem:[%s1610 + $0x10] sm:$0x7]
      %s1616 = scalar_lea.vmem %s256, 100
      %v1617 = vld [vmem:[%s1616] sm:$0x7]
      %v1618 = vld [vmem:[%s1616 + $0x4] sm:$0x7]
      %v1619 = vld [vmem:[%s1616 + $0x8] sm:$0x7]
      %v1620 = vld [vmem:[%s1616 + $0xc] sm:$0x7]
      %v1621 = vld [vmem:[%s1616 + $0x10] sm:$0x7]
      %1622 = vrot.lane.b32.xlu0 %v1281, 8
      %v1623 = vpop.permute.xlu0 %1622
      %1624 = vrot.lane.b32.xlu0 %v1288, 8
      %v1625 = vpop.permute.xlu0 %1624
      %1626 = vrot.lane.b32.xlu0 %v1295, 8
      %v1627 = vpop.permute.xlu0 %1626
      %1628 = vrot.lane.b32.xlu0 %v1302, 8
      %v1629 = vpop.permute.xlu0 %1628
      %1630 = vrot.lane.b32.xlu0 %v1309, 8
      %v1631 = vpop.permute.xlu0 %1630
      %1632 = vrot.lane.b32.xlu0 %v1330, 16
      %v1633 = vpop.permute.xlu0 %1632
      %1634 = vrot.lane.b32.xlu0 %v1331, 16
      %v1635 = vpop.permute.xlu0 %1634
      %1636 = vrot.lane.b32.xlu0 %v1332, 16
      %v1637 = vpop.permute.xlu0 %1636
      %1638 = vrot.lane.b32.xlu0 %v1333, 16
      %v1639 = vpop.permute.xlu0 %1638
      %1640 = vrot.lane.b32.xlu0 %v1334, 16
      %v1641 = vpop.permute.xlu0 %1640
      %1642 = vrot.lane.b32.xlu0 %v1351, 24
      %v1643 = vpop.permute.xlu0 %1642
      %1644 = vrot.lane.b32.xlu0 %v1358, 24
      %v1645 = vpop.permute.xlu0 %1644
      %1646 = vrot.lane.b32.xlu0 %v1365, 24
      %v1647 = vpop.permute.xlu0 %1646
      %1648 = vrot.lane.b32.xlu0 %v1372, 24
      %v1649 = vpop.permute.xlu0 %1648
      %1650 = vrot.lane.b32.xlu0 %v1379, 24
      %v1651 = vpop.permute.xlu0 %1650
      %v1657 = vunpack.c.l.b16 %v1611
      %v1658 = vunpack.c.l.b16 %v1612
      %v1659 = vunpack.c.l.b16 %v1613
      %v1660 = vunpack.c.l.b16 %v1614
      %v1661 = vunpack.c.l.b16 %v1615
      %v1662 = vpack.c.b16 %v1657, %v1657
      %v1663 = vpack.c.b16 %v1658, %v1658
      %v1664 = vpack.c.b16 %v1659, %v1659
      %v1665 = vpack.c.b16 %v1660, %v1660
      %v1666 = vpack.c.b16 %v1661, %v1661
      %1667 = vrot.lane.b32.xlu0 %v1662, 32
      %v1668 = vpop.permute.xlu0 %1667
      %1669 = vrot.lane.b32.xlu0 %v1663, 32
      %v1670 = vpop.permute.xlu0 %1669
      %1671 = vrot.lane.b32.xlu0 %v1664, 32
      %v1672 = vpop.permute.xlu0 %1671
      %1673 = vrot.lane.b32.xlu0 %v1665, 32
      %v1674 = vpop.permute.xlu0 %1673
      %1675 = vrot.lane.b32.xlu0 %v1666, 32
      %v1676 = vpop.permute.xlu0 %1675
      %v1678 = vshrl.u32 %v1662, 16
      %v1680 = vshll.u32 %v1662, 16
      %v1682 = vrot.slane %v1680, 1
      %v1683 = vor.u32 %v1678, %v1682
      %v1685 = vshrl.u32 %v1663, 16
      %v1687 = vshll.u32 %v1663, 16
      %v1689 = vrot.slane %v1687, 1
      %v1690 = vor.u32 %v1685, %v1689
      %v1692 = vshrl.u32 %v1664, 16
      %v1694 = vshll.u32 %v1664, 16
      %v1696 = vrot.slane %v1694, 1
      %v1697 = vor.u32 %v1692, %v1696
      %v1699 = vshrl.u32 %v1665, 16
      %v1701 = vshll.u32 %v1665, 16
      %v1703 = vrot.slane %v1701, 1
      %v1704 = vor.u32 %v1699, %v1703
      %v1706 = vshrl.u32 %v1666, 16
      %v1708 = vshll.u32 %v1666, 16
      %v1710 = vrot.slane %v1708, 1
      %v1711 = vor.u32 %v1706, %v1710
      %1712 = vrot.lane.b32.xlu0 %v1683, 40
      %v1713 = vpop.permute.xlu0 %1712
      %1714 = vrot.lane.b32.xlu0 %v1690, 40
      %v1715 = vpop.permute.xlu0 %1714
      %1716 = vrot.lane.b32.xlu0 %v1697, 40
      %v1717 = vpop.permute.xlu0 %1716
      %1718 = vrot.lane.b32.xlu0 %v1704, 40
      %v1719 = vpop.permute.xlu0 %1718
      %1720 = vrot.lane.b32.xlu0 %v1711, 40
      %v1721 = vpop.permute.xlu0 %1720
      %v1727 = vunpack.c.l.b16 %v1617
      %v1728 = vunpack.c.l.b16 %v1618
      %v1729 = vunpack.c.l.b16 %v1619
      %v1730 = vunpack.c.l.b16 %v1620
      %v1731 = vunpack.c.l.b16 %v1621
      %v1732 = vpack.c.b16 %v1727, %v1727
      %v1733 = vpack.c.b16 %v1728, %v1728
      %v1734 = vpack.c.b16 %v1729, %v1729
      %v1735 = vpack.c.b16 %v1730, %v1730
      %v1736 = vpack.c.b16 %v1731, %v1731
      %1737 = vrot.lane.b32.xlu0 %v1732, 48
      %v1738 = vpop.permute.xlu0 %1737
      %1739 = vrot.lane.b32.xlu0 %v1733, 48
      %v1740 = vpop.permute.xlu0 %1739
      %1741 = vrot.lane.b32.xlu0 %v1734, 48
      %v1742 = vpop.permute.xlu0 %1741
      %1743 = vrot.lane.b32.xlu0 %v1735, 48
      %v1744 = vpop.permute.xlu0 %1743
      %1745 = vrot.lane.b32.xlu0 %v1736, 48
      %v1746 = vpop.permute.xlu0 %1745
      %v1748 = vshrl.u32 %v1732, 16
      %v1750 = vshll.u32 %v1732, 16
      %v1752 = vrot.slane %v1750, 1
      %v1753 = vor.u32 %v1748, %v1752
      %v1755 = vshrl.u32 %v1733, 16
      %v1757 = vshll.u32 %v1733, 16
      %v1759 = vrot.slane %v1757, 1
      %v1760 = vor.u32 %v1755, %v1759
      %v1762 = vshrl.u32 %v1734, 16
      %v1764 = vshll.u32 %v1734, 16
      %v1766 = vrot.slane %v1764, 1
      %v1767 = vor.u32 %v1762, %v1766
      %v1769 = vshrl.u32 %v1735, 16
      %v1771 = vshll.u32 %v1735, 16
      %v1773 = vrot.slane %v1771, 1
      %v1774 = vor.u32 %v1769, %v1773
      %v1776 = vshrl.u32 %v1736, 16
      %v1778 = vshll.u32 %v1736, 16
      %v1780 = vrot.slane %v1778, 1
      %v1781 = vor.u32 %v1776, %v1780
      %1782 = vrot.lane.b32.xlu0 %v1753, 56
      %v1783 = vpop.permute.xlu0 %1782
      %1784 = vrot.lane.b32.xlu0 %v1760, 56
      %v1785 = vpop.permute.xlu0 %1784
      %1786 = vrot.lane.b32.xlu0 %v1767, 56
      %v1787 = vpop.permute.xlu0 %1786
      %1788 = vrot.lane.b32.xlu0 %v1774, 56
      %v1789 = vpop.permute.xlu0 %1788
      %1790 = vrot.lane.b32.xlu0 %v1781, 56
      %v1791 = vpop.permute.xlu0 %1790
      %v1794 = vsel %vm579, %v1209, %v1623
      %v1797 = vsel %vm579, %v1210, %v1625
      %v1800 = vsel %vm579, %v1211, %v1627
      %v1803 = vsel %vm579, %v1212, %v1629
      %v1806 = vsel %vm579, %v1213, %v1631
      %v1808 = vsel %vm595, %v1794, %v1633
      %v1810 = vsel %vm595, %v1797, %v1635
      %v1812 = vsel %vm595, %v1800, %v1637
      %v1814 = vsel %vm595, %v1803, %v1639
      %v1816 = vsel %vm595, %v1806, %v1641
      %v1818 = vsel %vm606, %v1808, %v1643
      %v1820 = vsel %vm606, %v1810, %v1645
      %v1822 = vsel %vm606, %v1812, %v1647
      %v1824 = vsel %vm606, %v1814, %v1649
      %v1826 = vsel %vm606, %v1816, %v1651
      %v1828 = vsel %vm617, %v1818, %v1668
      %v1830 = vsel %vm617, %v1820, %v1670
      %v1832 = vsel %vm617, %v1822, %v1672
      %v1834 = vsel %vm617, %v1824, %v1674
      %v1836 = vsel %vm617, %v1826, %v1676
      %v1838 = vsel %vm628, %v1828, %v1713
      %v1840 = vsel %vm628, %v1830, %v1715
      %v1842 = vsel %vm628, %v1832, %v1717
      %v1844 = vsel %vm628, %v1834, %v1719
      %v1846 = vsel %vm628, %v1836, %v1721
      %v1848 = vsel %vm639, %v1838, %v1738
      %v1850 = vsel %vm639, %v1840, %v1740
      %v1852 = vsel %vm639, %v1842, %v1742
      %v1854 = vsel %vm639, %v1844, %v1744
      %v1856 = vsel %vm639, %v1846, %v1746
      %v1858 = vsel %vm650, %v1848, %v1783
      %v1860 = vsel %vm650, %v1850, %v1785
      %v1862 = vsel %vm650, %v1852, %v1787
      %v1864 = vsel %vm650, %v1854, %v1789
      %v1866 = vsel %vm650, %v1856, %v1791
      %v1873 = vunpack.c.l.s4 1966171168
      %v1874 = vunpack.c.0.s8 %v1873
      %v1875 = vlaneseq
      %v1876 = vshrl.u32 %v1875, 7
      %v1877 = vsub.s32 %v1874, %v1876
      %v1878 = vrot.slane %v1858, %v1877
      %v1879 = vcombine.high %v1878, %v1878
      %v1881 = vunpack.c.l.s4 1966171168
      %v1882 = vunpack.c.0.s8 %v1881
      %v1883 = vlaneseq
      %v1884 = vshrl.u32 %v1883, 7
      %v1885 = vsub.s32 %v1882, %v1884
      %v1886 = vrot.slane %v1878, %v1885
      %v1888 = vunpack.c.l.s4 1966171168
      %v1889 = vunpack.c.0.s8 %v1888
      %v1890 = vlaneseq
      %v1891 = vshrl.u32 %v1890, 7
      %v1892 = vsub.s32 %v1889, %v1891
      %v1893 = vrot.slane %v1879, %v1892
      %v1894 = vcombine.high %v1886, %v1886
      %v1896 = vunpack.c.l.s4 1966171168
      %v1897 = vunpack.c.0.s8 %v1896
      %v1898 = vlaneseq
      %v1899 = vshrl.u32 %v1898, 7
      %v1900 = vsub.s32 %v1897, %v1899
      %v1901 = vrot.slane %v1860, %v1900
      %v1902 = vcombine.high %v1901, %v1901
      %v1904 = vunpack.c.l.s4 1966171168
      %v1905 = vunpack.c.0.s8 %v1904
      %v1906 = vlaneseq
      %v1907 = vshrl.u32 %v1906, 7
      %v1908 = vsub.s32 %v1905, %v1907
      %v1909 = vrot.slane %v1901, %v1908
      %v1911 = vunpack.c.l.s4 1966171168
      %v1912 = vunpack.c.0.s8 %v1911
      %v1913 = vlaneseq
      %v1914 = vshrl.u32 %v1913, 7
      %v1915 = vsub.s32 %v1912, %v1914
      %v1916 = vrot.slane %v1902, %v1915
      %v1917 = vcombine.high %v1909, %v1909
      %v1919 = vunpack.c.l.s4 1966171168
      %v1920 = vunpack.c.0.s8 %v1919
      %v1921 = vlaneseq
      %v1922 = vshrl.u32 %v1921, 7
      %v1923 = vsub.s32 %v1920, %v1922
      %v1924 = vrot.slane %v1862, %v1923
      %v1925 = vcombine.high %v1924, %v1924
      %v1927 = vunpack.c.l.s4 1966171168
      %v1928 = vunpack.c.0.s8 %v1927
      %v1929 = vlaneseq
      %v1930 = vshrl.u32 %v1929, 7
      %v1931 = vsub.s32 %v1928, %v1930
      %v1932 = vrot.slane %v1924, %v1931
      %v1934 = vunpack.c.l.s4 1966171168
      %v1935 = vunpack.c.0.s8 %v1934
      %v1936 = vlaneseq
      %v1937 = vshrl.u32 %v1936, 7
      %v1938 = vsub.s32 %v1935, %v1937
      %v1939 = vrot.slane %v1925, %v1938
      %v1940 = vcombine.high %v1932, %v1932
      %v1942 = vunpack.c.l.s4 1966171168
      %v1943 = vunpack.c.0.s8 %v1942
      %v1944 = vlaneseq
      %v1945 = vshrl.u32 %v1944, 7
      %v1946 = vsub.s32 %v1943, %v1945
      %v1947 = vrot.slane %v1864, %v1946
      %v1948 = vcombine.high %v1947, %v1947
      %v1950 = vunpack.c.l.s4 1966171168
      %v1951 = vunpack.c.0.s8 %v1950
      %v1952 = vlaneseq
      %v1953 = vshrl.u32 %v1952, 7
      %v1954 = vsub.s32 %v1951, %v1953
      %v1955 = vrot.slane %v1947, %v1954
      %v1957 = vunpack.c.l.s4 1966171168
      %v1958 = vunpack.c.0.s8 %v1957
      %v1959 = vlaneseq
      %v1960 = vshrl.u32 %v1959, 7
      %v1961 = vsub.s32 %v1958, %v1960
      %v1962 = vrot.slane %v1948, %v1961
      %v1963 = vcombine.high %v1955, %v1955
      %v1965 = vunpack.c.l.s4 1966171168
      %v1966 = vunpack.c.0.s8 %v1965
      %v1967 = vlaneseq
      %v1968 = vshrl.u32 %v1967, 7
      %v1969 = vsub.s32 %v1966, %v1968
      %v1970 = vrot.slane %v1866, %v1969
      %v1971 = vcombine.high %v1970, %v1970
      %v1973 = vunpack.c.l.s4 1966171168
      %v1974 = vunpack.c.0.s8 %v1973
      %v1975 = vlaneseq
      %v1976 = vshrl.u32 %v1975, 7
      %v1977 = vsub.s32 %v1974, %v1976
      %v1978 = vrot.slane %v1970, %v1977
      %v1980 = vunpack.c.l.s4 1966171168
      %v1981 = vunpack.c.0.s8 %v1980
      %v1982 = vlaneseq
      %v1983 = vshrl.u32 %v1982, 7
      %v1984 = vsub.s32 %v1981, %v1983
      %v1985 = vrot.slane %v1971, %v1984
      %v1986 = vcombine.high %v1978, %v1978
      %v1987 = vunpack.i.l.s16 %v1886
      %v1988 = vunpack.i.h.s16 %v1886
      %v1989 = vunpack.i.l.s16 %v1893
      %v1990 = vunpack.i.h.s16 %v1893
      %v1991 = vunpack.i.l.s16 %v1894
      %v1992 = vunpack.i.l.s16 %v1909
      %v1993 = vunpack.i.h.s16 %v1909
      %v1994 = vunpack.i.l.s16 %v1916
      %v1995 = vunpack.i.h.s16 %v1916
      %v1996 = vunpack.i.l.s16 %v1917
      %v1997 = vunpack.i.l.s16 %v1932
      %v1998 = vunpack.i.h.s16 %v1932
      %v1999 = vunpack.i.l.s16 %v1939
      %v2000 = vunpack.i.h.s16 %v1939
      %v2001 = vunpack.i.l.s16 %v1940
      %v2002 = vunpack.i.l.s16 %v1955
      %v2003 = vunpack.i.h.s16 %v1955
      %v2004 = vunpack.i.l.s16 %v1962
      %v2005 = vunpack.i.h.s16 %v1962
      %v2006 = vunpack.i.l.s16 %v1963
      %v2007 = vunpack.i.l.s16 %v1978
      %v2008 = vunpack.i.h.s16 %v1978
      %v2009 = vunpack.i.l.s16 %v1985
      %v2010 = vunpack.i.h.s16 %v1985
      %v2011 = vunpack.i.l.s16 %v1986
      %v2012 = vld [vmem:[%s273] sm:$0x7]
      %v2013 = vld [vmem:[%s273 + $0x4] sm:$0x7]
      %v2014 = vld [vmem:[%s273 + $0x8] sm:$0x7]
      %v2015 = vld [vmem:[%s273 + $0xc] sm:$0x7]
      %v2016 = vld [vmem:[%s273 + $0x10] sm:$0x7]
      %s2017 = scalar_lea.vmem %s273, 4
      %v2018 = vld [vmem:[%s2017] sm:$0x7]
      %v2019 = vld [vmem:[%s2017 + $0x4] sm:$0x7]
      %v2020 = vld [vmem:[%s2017 + $0x8] sm:$0x7]
      %v2021 = vld [vmem:[%s2017 + $0xc] sm:$0x7]
      %v2022 = vld [vmem:[%s2017 + $0x10] sm:$0x7]
      %2023 = vrot.lane.b32.xlu0 %v1683, 8
      %v2024 = vpop.permute.xlu0 %2023
      %2025 = vrot.lane.b32.xlu0 %v1690, 8
      %v2026 = vpop.permute.xlu0 %2025
      %2027 = vrot.lane.b32.xlu0 %v1697, 8
      %v2028 = vpop.permute.xlu0 %2027
      %2029 = vrot.lane.b32.xlu0 %v1704, 8
      %v2030 = vpop.permute.xlu0 %2029
      %2031 = vrot.lane.b32.xlu0 %v1711, 8
      %v2032 = vpop.permute.xlu0 %2031
      %2033 = vrot.lane.b32.xlu0 %v1732, 16
      %v2034 = vpop.permute.xlu0 %2033
      %2035 = vrot.lane.b32.xlu0 %v1733, 16
      %v2036 = vpop.permute.xlu0 %2035
      %2037 = vrot.lane.b32.xlu0 %v1734, 16
      %v2038 = vpop.permute.xlu0 %2037
      %2039 = vrot.lane.b32.xlu0 %v1735, 16
      %v2040 = vpop.permute.xlu0 %2039
      %2041 = vrot.lane.b32.xlu0 %v1736, 16
      %v2042 = vpop.permute.xlu0 %2041
      %2043 = vrot.lane.b32.xlu0 %v1753, 24
      %v2044 = vpop.permute.xlu0 %2043
      %2045 = vrot.lane.b32.xlu0 %v1760, 24
      %v2046 = vpop.permute.xlu0 %2045
      %2047 = vrot.lane.b32.xlu0 %v1767, 24
      %v2048 = vpop.permute.xlu0 %2047
      %2049 = vrot.lane.b32.xlu0 %v1774, 24
      %v2050 = vpop.permute.xlu0 %2049
      %2051 = vrot.lane.b32.xlu0 %v1781, 24
      %v2052 = vpop.permute.xlu0 %2051
      %v2058 = vunpack.c.l.b16 %v2012
      %v2059 = vunpack.c.l.b16 %v2013
      %v2060 = vunpack.c.l.b16 %v2014
      %v2061 = vunpack.c.l.b16 %v2015
      %v2062 = vunpack.c.l.b16 %v2016
      %v2063 = vpack.c.b16 %v2058, %v2058
      %v2064 = vpack.c.b16 %v2059, %v2059
      %v2065 = vpack.c.b16 %v2060, %v2060
      %v2066 = vpack.c.b16 %v2061, %v2061
      %v2067 = vpack.c.b16 %v2062, %v2062
      %2068 = vrot.lane.b32.xlu0 %v2063, 32
      %v2069 = vpop.permute.xlu0 %2068
      %2070 = vrot.lane.b32.xlu0 %v2064, 32
      %v2071 = vpop.permute.xlu0 %2070
      %2072 = vrot.lane.b32.xlu0 %v2065, 32
      %v2073 = vpop.permute.xlu0 %2072
      %2074 = vrot.lane.b32.xlu0 %v2066, 32
      %v2075 = vpop.permute.xlu0 %2074
      %2076 = vrot.lane.b32.xlu0 %v2067, 32
      %v2077 = vpop.permute.xlu0 %2076
      %v2079 = vshrl.u32 %v2063, 16
      %v2081 = vshll.u32 %v2063, 16
      %v2083 = vrot.slane %v2081, 1
      %v2084 = vor.u32 %v2079, %v2083
      %v2086 = vshrl.u32 %v2064, 16
      %v2088 = vshll.u32 %v2064, 16
      %v2090 = vrot.slane %v2088, 1
      %v2091 = vor.u32 %v2086, %v2090
      %v2093 = vshrl.u32 %v2065, 16
      %v2095 = vshll.u32 %v2065, 16
      %v2097 = vrot.slane %v2095, 1
      %v2098 = vor.u32 %v2093, %v2097
      %v2100 = vshrl.u32 %v2066, 16
      %v2102 = vshll.u32 %v2066, 16
      %v2104 = vrot.slane %v2102, 1
      %v2105 = vor.u32 %v2100, %v2104
      %v2107 = vshrl.u32 %v2067, 16
      %v2109 = vshll.u32 %v2067, 16
      %v2111 = vrot.slane %v2109, 1
      %v2112 = vor.u32 %v2107, %v2111
      %2113 = vrot.lane.b32.xlu0 %v2084, 40
      %v2114 = vpop.permute.xlu0 %2113
      %2115 = vrot.lane.b32.xlu0 %v2091, 40
      %v2116 = vpop.permute.xlu0 %2115
      %2117 = vrot.lane.b32.xlu0 %v2098, 40
      %v2118 = vpop.permute.xlu0 %2117
      %2119 = vrot.lane.b32.xlu0 %v2105, 40
      %v2120 = vpop.permute.xlu0 %2119
      %2121 = vrot.lane.b32.xlu0 %v2112, 40
      %v2122 = vpop.permute.xlu0 %2121
      %v2128 = vunpack.c.l.b16 %v2018
      %v2129 = vunpack.c.l.b16 %v2019
      %v2130 = vunpack.c.l.b16 %v2020
      %v2131 = vunpack.c.l.b16 %v2021
      %v2132 = vunpack.c.l.b16 %v2022
      %v2133 = vpack.c.b16 %v2128, %v2128
      %v2134 = vpack.c.b16 %v2129, %v2129
      %v2135 = vpack.c.b16 %v2130, %v2130
      %v2136 = vpack.c.b16 %v2131, %v2131
      %v2137 = vpack.c.b16 %v2132, %v2132
      %2138 = vrot.lane.b32.xlu0 %v2133, 48
      %v2139 = vpop.permute.xlu0 %2138
      %2140 = vrot.lane.b32.xlu0 %v2134, 48
      %v2141 = vpop.permute.xlu0 %2140
      %2142 = vrot.lane.b32.xlu0 %v2135, 48
      %v2143 = vpop.permute.xlu0 %2142
      %2144 = vrot.lane.b32.xlu0 %v2136, 48
      %v2145 = vpop.permute.xlu0 %2144
      %2146 = vrot.lane.b32.xlu0 %v2137, 48
      %v2147 = vpop.permute.xlu0 %2146
      %v2149 = vshrl.u32 %v2133, 16
      %v2151 = vshll.u32 %v2133, 16
      %v2153 = vrot.slane %v2151, 1
      %v2154 = vor.u32 %v2149, %v2153
      %v2156 = vshrl.u32 %v2134, 16
      %v2158 = vshll.u32 %v2134, 16
      %v2160 = vrot.slane %v2158, 1
      %v2161 = vor.u32 %v2156, %v2160
      %v2163 = vshrl.u32 %v2135, 16
      %v2165 = vshll.u32 %v2135, 16
      %v2167 = vrot.slane %v2165, 1
      %v2168 = vor.u32 %v2163, %v2167
      %v2170 = vshrl.u32 %v2136, 16
      %v2172 = vshll.u32 %v2136, 16
      %v2174 = vrot.slane %v2172, 1
      %v2175 = vor.u32 %v2170, %v2174
      %v2177 = vshrl.u32 %v2137, 16
      %v2179 = vshll.u32 %v2137, 16
      %v2181 = vrot.slane %v2179, 1
      %v2182 = vor.u32 %v2177, %v2181
      %2183 = vrot.lane.b32.xlu0 %v2154, 56
      %v2184 = vpop.permute.xlu0 %2183
      %2185 = vrot.lane.b32.xlu0 %v2161, 56
      %v2186 = vpop.permute.xlu0 %2185
      %2187 = vrot.lane.b32.xlu0 %v2168, 56
      %v2188 = vpop.permute.xlu0 %2187
      %2189 = vrot.lane.b32.xlu0 %v2175, 56
      %v2190 = vpop.permute.xlu0 %2189
      %2191 = vrot.lane.b32.xlu0 %v2182, 56
      %v2192 = vpop.permute.xlu0 %2191
      %v2195 = vsel %vm579, %v1611, %v2024
      %v2198 = vsel %vm579, %v1612, %v2026
      %v2201 = vsel %vm579, %v1613, %v2028
      %v2204 = vsel %vm579, %v1614, %v2030
      %v2207 = vsel %vm579, %v1615, %v2032
      %v2209 = vsel %vm595, %v2195, %v2034
      %v2211 = vsel %vm595, %v2198, %v2036
      %v2213 = vsel %vm595, %v2201, %v2038
      %v2215 = vsel %vm595, %v2204, %v2040
      %v2217 = vsel %vm595, %v2207, %v2042
      %v2219 = vsel %vm606, %v2209, %v2044
      %v2221 = vsel %vm606, %v2211, %v2046
      %v2223 = vsel %vm606, %v2213, %v2048
      %v2225 = vsel %vm606, %v2215, %v2050
      %v2227 = vsel %vm606, %v2217, %v2052
      %v2229 = vsel %vm617, %v2219, %v2069
      %v2231 = vsel %vm617, %v2221, %v2071
      %v2233 = vsel %vm617, %v2223, %v2073
      %v2235 = vsel %vm617, %v2225, %v2075
      %v2237 = vsel %vm617, %v2227, %v2077
      %v2239 = vsel %vm628, %v2229, %v2114
      %v2241 = vsel %vm628, %v2231, %v2116
      %v2243 = vsel %vm628, %v2233, %v2118
      %v2245 = vsel %vm628, %v2235, %v2120
      %v2247 = vsel %vm628, %v2237, %v2122
      %v2249 = vsel %vm639, %v2239, %v2139
      %v2251 = vsel %vm639, %v2241, %v2141
      %v2253 = vsel %vm639, %v2243, %v2143
      %v2255 = vsel %vm639, %v2245, %v2145
      %v2257 = vsel %vm639, %v2247, %v2147
      %v2259 = vsel %vm650, %v2249, %v2184
      %v2261 = vsel %vm650, %v2251, %v2186
      %v2263 = vsel %vm650, %v2253, %v2188
      %v2265 = vsel %vm650, %v2255, %v2190
      %v2267 = vsel %vm650, %v2257, %v2192
      %v2274 = vunpack.c.l.s4 1966171168
      %v2275 = vunpack.c.0.s8 %v2274
      %v2276 = vlaneseq
      %v2277 = vshrl.u32 %v2276, 7
      %v2278 = vsub.s32 %v2275, %v2277
      %v2279 = vrot.slane %v2259, %v2278
      %v2280 = vcombine.high %v2279, %v2279
      %v2282 = vunpack.c.l.s4 1966171168
      %v2283 = vunpack.c.0.s8 %v2282
      %v2284 = vlaneseq
      %v2285 = vshrl.u32 %v2284, 7
      %v2286 = vsub.s32 %v2283, %v2285
      %v2287 = vrot.slane %v2279, %v2286
      %v2289 = vunpack.c.l.s4 1966171168
      %v2290 = vunpack.c.0.s8 %v2289
      %v2291 = vlaneseq
      %v2292 = vshrl.u32 %v2291, 7
      %v2293 = vsub.s32 %v2290, %v2292
      %v2294 = vrot.slane %v2280, %v2293
      %v2295 = vcombine.high %v2287, %v2287
      %v2297 = vunpack.c.l.s4 1966171168
      %v2298 = vunpack.c.0.s8 %v2297
      %v2299 = vlaneseq
      %v2300 = vshrl.u32 %v2299, 7
      %v2301 = vsub.s32 %v2298, %v2300
      %v2302 = vrot.slane %v2261, %v2301
      %v2303 = vcombine.high %v2302, %v2302
      %v2305 = vunpack.c.l.s4 1966171168
      %v2306 = vunpack.c.0.s8 %v2305
      %v2307 = vlaneseq
      %v2308 = vshrl.u32 %v2307, 7
      %v2309 = vsub.s32 %v2306, %v2308
      %v2310 = vrot.slane %v2302, %v2309
      %v2312 = vunpack.c.l.s4 1966171168
      %v2313 = vunpack.c.0.s8 %v2312
      %v2314 = vlaneseq
      %v2315 = vshrl.u32 %v2314, 7
      %v2316 = vsub.s32 %v2313, %v2315
      %v2317 = vrot.slane %v2303, %v2316
      %v2318 = vcombine.high %v2310, %v2310
      %v2320 = vunpack.c.l.s4 1966171168
      %v2321 = vunpack.c.0.s8 %v2320
      %v2322 = vlaneseq
      %v2323 = vshrl.u32 %v2322, 7
      %v2324 = vsub.s32 %v2321, %v2323
      %v2325 = vrot.slane %v2263, %v2324
      %v2326 = vcombine.high %v2325, %v2325
      %v2328 = vunpack.c.l.s4 1966171168
      %v2329 = vunpack.c.0.s8 %v2328
      %v2330 = vlaneseq
      %v2331 = vshrl.u32 %v2330, 7
      %v2332 = vsub.s32 %v2329, %v2331
      %v2333 = vrot.slane %v2325, %v2332
      %v2335 = vunpack.c.l.s4 1966171168
      %v2336 = vunpack.c.0.s8 %v2335
      %v2337 = vlaneseq
      %v2338 = vshrl.u32 %v2337, 7
      %v2339 = vsub.s32 %v2336, %v2338
      %v2340 = vrot.slane %v2326, %v2339
      %v2341 = vcombine.high %v2333, %v2333
      %v2343 = vunpack.c.l.s4 1966171168
      %v2344 = vunpack.c.0.s8 %v2343
      %v2345 = vlaneseq
      %v2346 = vshrl.u32 %v2345, 7
      %v2347 = vsub.s32 %v2344, %v2346
      %v2348 = vrot.slane %v2265, %v2347
      %v2349 = vcombine.high %v2348, %v2348
      %v2351 = vunpack.c.l.s4 1966171168
      %v2352 = vunpack.c.0.s8 %v2351
      %v2353 = vlaneseq
      %v2354 = vshrl.u32 %v2353, 7
      %v2355 = vsub.s32 %v2352, %v2354
      %v2356 = vrot.slane %v2348, %v2355
      %v2358 = vunpack.c.l.s4 1966171168
      %v2359 = vunpack.c.0.s8 %v2358
      %v2360 = vlaneseq
      %v2361 = vshrl.u32 %v2360, 7
      %v2362 = vsub.s32 %v2359, %v2361
      %v2363 = vrot.slane %v2349, %v2362
      %v2364 = vcombine.high %v2356, %v2356
      %v2366 = vunpack.c.l.s4 1966171168
      %v2367 = vunpack.c.0.s8 %v2366
      %v2368 = vlaneseq
      %v2369 = vshrl.u32 %v2368, 7
      %v2370 = vsub.s32 %v2367, %v2369
      %v2371 = vrot.slane %v2267, %v2370
      %v2372 = vcombine.high %v2371, %v2371
      %v2374 = vunpack.c.l.s4 1966171168
      %v2375 = vunpack.c.0.s8 %v2374
      %v2376 = vlaneseq
      %v2377 = vshrl.u32 %v2376, 7
      %v2378 = vsub.s32 %v2375, %v2377
      %v2379 = vrot.slane %v2371, %v2378
      %v2381 = vunpack.c.l.s4 1966171168
      %v2382 = vunpack.c.0.s8 %v2381
      %v2383 = vlaneseq
      %v2384 = vshrl.u32 %v2383, 7
      %v2385 = vsub.s32 %v2382, %v2384
      %v2386 = vrot.slane %v2372, %v2385
      %v2387 = vcombine.high %v2379, %v2379
      %v2388 = vunpack.i.l.s16 %v2287
      %v2389 = vunpack.i.h.s16 %v2287
      %v2390 = vunpack.i.l.s16 %v2294
      %v2391 = vunpack.i.h.s16 %v2294
      %v2392 = vunpack.i.l.s16 %v2295
      %v2393 = vunpack.i.l.s16 %v2310
      %v2394 = vunpack.i.h.s16 %v2310
      %v2395 = vunpack.i.l.s16 %v2317
      %v2396 = vunpack.i.h.s16 %v2317
      %v2397 = vunpack.i.l.s16 %v2318
      %v2398 = vunpack.i.l.s16 %v2333
      %v2399 = vunpack.i.h.s16 %v2333
      %v2400 = vunpack.i.l.s16 %v2340
      %v2401 = vunpack.i.h.s16 %v2340
      %v2402 = vunpack.i.l.s16 %v2341
      %v2403 = vunpack.i.l.s16 %v2356
      %v2404 = vunpack.i.h.s16 %v2356
      %v2405 = vunpack.i.l.s16 %v2363
      %v2406 = vunpack.i.h.s16 %v2363
      %v2407 = vunpack.i.l.s16 %v2364
      %v2408 = vunpack.i.l.s16 %v2379
      %v2409 = vunpack.i.h.s16 %v2379
      %v2410 = vunpack.i.l.s16 %v2386
      %v2411 = vunpack.i.h.s16 %v2386
      %v2412 = vunpack.i.l.s16 %v2387
      %v2413 = vpack.i.b16 %v782, %v781
      %v2414 = vpack.i.b16 %v784, %v783
      %v2415 = vpack.i.b16 %v786, %v785
      %v2416 = vpack.i.b16 %v788, %v787
      %v2417 = vpack.i.b16 %v790, %v789
      %v2418 = vpack.i.b16 %v792, %v791
      %v2419 = vpack.i.b16 %v794, %v793
      %v2420 = vpack.i.b16 %v796, %v795
      %v2421 = vpack.i.b16 %v798, %v797
      %v2422 = vpack.i.b16 %v800, %v799
      %v2423 = vpack.i.b16 %v802, %v801
      %v2424 = vpack.i.b16 %v804, %v803
      %v2426 = vcombine.low %v2413, %v2414
      %v2427 = vcombine.low %v2415, %v2416
      %v2428 = vcombine.low %v2417, %v2418
      %v2429 = vcombine.low %v2419, %v2420
      %v2431 = vunpack.c.l.s4 1966171168
      %v2432 = vunpack.c.0.s8 %v2431
      %v2433 = vlaneseq
      %v2434 = vshrl.u32 %v2433, 7
      %v2435 = vsub.s32 %v2432, %v2434
      %v2436 = vrot.slane %v2426, %v2435
      %v2438 = vunpack.c.l.s4 1966171168
      %v2439 = vunpack.c.0.s8 %v2438
      %v2440 = vlaneseq
      %v2441 = vshrl.u32 %v2440, 7
      %v2442 = vsub.s32 %v2439, %v2441
      %v2443 = vrot.slane %v2427, %v2442
      %v2445 = vunpack.c.l.s4 1966171168
      %v2446 = vunpack.c.0.s8 %v2445
      %v2447 = vlaneseq
      %v2448 = vshrl.u32 %v2447, 7
      %v2449 = vsub.s32 %v2446, %v2448
      %v2450 = vrot.slane %v2428, %v2449
      %v2452 = vunpack.c.l.s4 1966171168
      %v2453 = vunpack.c.0.s8 %v2452
      %v2454 = vlaneseq
      %v2455 = vshrl.u32 %v2454, 7
      %v2456 = vsub.s32 %v2453, %v2455
      %v2457 = vrot.slane %v2429, %v2456
      %v2458 = vcombine.low %v2436, %v2443
      %v2459 = vcombine.low %v2450, %v2457
      %v2461 = vunpack.c.l.s4 1966171168
      %v2462 = vunpack.c.0.s8 %v2461
      %v2463 = vlaneseq
      %v2464 = vshrl.u32 %v2463, 7
      %v2465 = vsub.s32 %v2462, %v2464
      %v2466 = vrot.slane %v2458, %v2465
      %v2468 = vunpack.c.l.s4 1966171168
      %v2469 = vunpack.c.0.s8 %v2468
      %v2470 = vlaneseq
      %v2471 = vshrl.u32 %v2470, 7
      %v2472 = vsub.s32 %v2469, %v2471
      %v2473 = vrot.slane %v2459, %v2472
      %v2474 = vcombine.low %v2466, %v2473
      %v2475 = vcombine.low %v2421, %v2422
      %v2476 = vcombine.low %v2423, %v2424
      %v2478 = vunpack.c.l.s4 1966171168
      %v2479 = vunpack.c.0.s8 %v2478
      %v2480 = vlaneseq
      %v2481 = vshrl.u32 %v2480, 7
      %v2482 = vsub.s32 %v2479, %v2481
      %v2483 = vrot.slane %v2475, %v2482
      %v2485 = vunpack.c.l.s4 1966171168
      %v2486 = vunpack.c.0.s8 %v2485
      %v2487 = vlaneseq
      %v2488 = vshrl.u32 %v2487, 7
      %v2489 = vsub.s32 %v2486, %v2488
      %v2490 = vrot.slane %v2476, %v2489
      %v2492 = vunpack.c.l.s4 1966171168
      %v2493 = vunpack.c.0.s8 %v2492
      %v2494 = vlaneseq
      %v2495 = vshrl.u32 %v2494, 7
      %v2496 = vsub.s32 %v2493, %v2495
      %v2497 = vrot.slane %v805, %v2496
      %v2498 = vcombine.low %v2483, %v2490
      %v2500 = vunpack.c.l.s4 1966171168
      %v2501 = vunpack.c.0.s8 %v2500
      %v2502 = vlaneseq
      %v2503 = vshrl.u32 %v2502, 7
      %v2504 = vsub.s32 %v2501, %v2503
      %v2505 = vrot.slane %v2498, %v2504
      %v2507 = vunpack.c.l.s4 1966171168
      %v2508 = vunpack.c.0.s8 %v2507
      %v2509 = vlaneseq
      %v2510 = vshrl.u32 %v2509, 7
      %v2511 = vsub.s32 %v2508, %v2510
      %v2512 = vrot.slane %v2497, %v2511
      %v2513 = vcombine.low %v2505, %v2512
      %v2515 = vpack.i.b16 %v1183, %v1183
      %v2516 = vpack.i.b16 %v1185, %v1184
      %v2517 = vpack.i.b16 %v1187, %v1186
      %v2518 = vpack.i.b16 %v1189, %v1188
      %v2519 = vpack.i.b16 %v1191, %v1190
      %v2520 = vpack.i.b16 %v1193, %v1192
      %v2521 = vpack.i.b16 %v1195, %v1194
      %v2522 = vpack.i.b16 %v1197, %v1196
      %v2523 = vpack.i.b16 %v1199, %v1198
      %v2524 = vpack.i.b16 %v1201, %v1200
      %v2525 = vpack.i.b16 %v1203, %v1202
      %v2526 = vpack.i.b16 %v1205, %v1204
      %v2527 = vpack.i.b16 %v1207, %v1206
      %v2528 = vcombine.low %v2515, %v2516
      %v2529 = vcombine.low %v2517, %v2518
      %v2531 = vunpack.c.l.s4 1966171168
      %v2532 = vunpack.c.0.s8 %v2531
      %v2533 = vlaneseq
      %v2534 = vshrl.u32 %v2533, 7
      %v2535 = vsub.s32 %v2532, %v2534
      %v2536 = vrot.slane %v2528, %v2535
      %v2538 = vunpack.c.l.s4 1966171168
      %v2539 = vunpack.c.0.s8 %v2538
      %v2540 = vlaneseq
      %v2541 = vshrl.u32 %v2540, 7
      %v2542 = vsub.s32 %v2539, %v2541
      %v2543 = vrot.slane %v2529, %v2542
      %v2544 = vcombine.low %v2536, %v2543
      %v2546 = vunpack.c.l.s4 1966171168
      %v2547 = vunpack.c.0.s8 %v2546
      %v2548 = vlaneseq
      %v2549 = vshrl.u32 %v2548, 7
      %v2550 = vsub.s32 %v2547, %v2549
      %v2551 = vrot.slane %v2544, %v2550
      %v2552 = vcombine.low %v2551, %v2551
      %v2553 = vcombine.low %v2519, %v2520
      %v2554 = vcombine.low %v2521, %v2522
      %v2555 = vcombine.low %v2523, %v2524
      %v2556 = vcombine.low %v2525, %v2526
      %v2558 = vunpack.c.l.s4 1966171168
      %v2559 = vunpack.c.0.s8 %v2558
      %v2560 = vlaneseq
      %v2561 = vshrl.u32 %v2560, 7
      %v2562 = vsub.s32 %v2559, %v2561
      %v2563 = vrot.slane %v2553, %v2562
      %v2565 = vunpack.c.l.s4 1966171168
      %v2566 = vunpack.c.0.s8 %v2565
      %v2567 = vlaneseq
      %v2568 = vshrl.u32 %v2567, 7
      %v2569 = vsub.s32 %v2566, %v2568
      %v2570 = vrot.slane %v2554, %v2569
      %v2572 = vunpack.c.l.s4 1966171168
      %v2573 = vunpack.c.0.s8 %v2572
      %v2574 = vlaneseq
      %v2575 = vshrl.u32 %v2574, 7
      %v2576 = vsub.s32 %v2573, %v2575
      %v2577 = vrot.slane %v2555, %v2576
      %v2579 = vunpack.c.l.s4 1966171168
      %v2580 = vunpack.c.0.s8 %v2579
      %v2581 = vlaneseq
      %v2582 = vshrl.u32 %v2581, 7
      %v2583 = vsub.s32 %v2580, %v2582
      %v2584 = vrot.slane %v2556, %v2583
      %v2585 = vcombine.low %v2563, %v2570
      %v2586 = vcombine.low %v2577, %v2584
      %v2588 = vunpack.c.l.s4 1966171168
      %v2589 = vunpack.c.0.s8 %v2588
      %v2590 = vlaneseq
      %v2591 = vshrl.u32 %v2590, 7
      %v2592 = vsub.s32 %v2589, %v2591
      %v2593 = vrot.slane %v2585, %v2592
      %v2595 = vunpack.c.l.s4 1966171168
      %v2596 = vunpack.c.0.s8 %v2595
      %v2597 = vlaneseq
      %v2598 = vshrl.u32 %v2597, 7
      %v2599 = vsub.s32 %v2596, %v2598
      %v2600 = vrot.slane %v2586, %v2599
      %v2601 = vcombine.low %v2593, %v2600
      %v2603 = vunpack.c.l.s4 1966171168
      %v2604 = vunpack.c.0.s8 %v2603
      %v2605 = vlaneseq
      %v2606 = vshrl.u32 %v2605, 7
      %v2607 = vsub.s32 %v2604, %v2606
      %v2608 = vrot.slane %v2527, %v2607
      %v2610 = vunpack.c.l.s4 1966171168
      %v2611 = vunpack.c.0.s8 %v2610
      %v2612 = vlaneseq
      %v2613 = vshrl.u32 %v2612, 7
      %v2614 = vsub.s32 %v2611, %v2613
      %v2615 = vrot.slane %v2608, %v2614
      %v2617 = vpack.i.b16 %v1586, %v1585
      %v2618 = vpack.i.b16 %v1588, %v1587
      %v2619 = vpack.i.b16 %v1590, %v1589
      %v2620 = vpack.i.b16 %v1592, %v1591
      %v2621 = vpack.i.b16 %v1594, %v1593
      %v2622 = vpack.i.b16 %v1596, %v1595
      %v2623 = vpack.i.b16 %v1598, %v1597
      %v2624 = vpack.i.b16 %v1600, %v1599
      %v2625 = vpack.i.b16 %v1602, %v1601
      %v2626 = vpack.i.b16 %v1604, %v1603
      %v2627 = vpack.i.b16 %v1606, %v1605
      %v2628 = vpack.i.b16 %v1608, %v1607
      %v2630 = vcombine.low %v2617, %v2617
      %v2631 = vcombine.low %v2618, %v2619
      %v2632 = vcombine.low %v2620, %v2621
      %v2633 = vcombine.low %v2622, %v2623
      %v2635 = vunpack.c.l.s4 1966171168
      %v2636 = vunpack.c.0.s8 %v2635
      %v2637 = vlaneseq
      %v2638 = vshrl.u32 %v2637, 7
      %v2639 = vsub.s32 %v2636, %v2638
      %v2640 = vrot.slane %v2630, %v2639
      %v2642 = vunpack.c.l.s4 1966171168
      %v2643 = vunpack.c.0.s8 %v2642
      %v2644 = vlaneseq
      %v2645 = vshrl.u32 %v2644, 7
      %v2646 = vsub.s32 %v2643, %v2645
      %v2647 = vrot.slane %v2631, %v2646
      %v2649 = vunpack.c.l.s4 1966171168
      %v2650 = vunpack.c.0.s8 %v2649
      %v2651 = vlaneseq
      %v2652 = vshrl.u32 %v2651, 7
      %v2653 = vsub.s32 %v2650, %v2652
      %v2654 = vrot.slane %v2632, %v2653
      %v2656 = vunpack.c.l.s4 1966171168
      %v2657 = vunpack.c.0.s8 %v2656
      %v2658 = vlaneseq
      %v2659 = vshrl.u32 %v2658, 7
      %v2660 = vsub.s32 %v2657, %v2659
      %v2661 = vrot.slane %v2633, %v2660
      %v2662 = vcombine.low %v2640, %v2647
      %v2663 = vcombine.low %v2654, %v2661
      %v2665 = vunpack.c.l.s4 1966171168
      %v2666 = vunpack.c.0.s8 %v2665
      %v2667 = vlaneseq
      %v2668 = vshrl.u32 %v2667, 7
      %v2669 = vsub.s32 %v2666, %v2668
      %v2670 = vrot.slane %v2662, %v2669
      %v2672 = vunpack.c.l.s4 1966171168
      %v2673 = vunpack.c.0.s8 %v2672
      %v2674 = vlaneseq
      %v2675 = vshrl.u32 %v2674, 7
      %v2676 = vsub.s32 %v2673, %v2675
      %v2677 = vrot.slane %v2663, %v2676
      %v2678 = vcombine.low %v2670, %v2677
      %v2679 = vcombine.low %v2624, %v2625
      %v2680 = vcombine.low %v2626, %v2627
      %v2681 = vcombine.low %v2628, %v1609
      %v2683 = vunpack.c.l.s4 1966171168
      %v2684 = vunpack.c.0.s8 %v2683
      %v2685 = vlaneseq
      %v2686 = vshrl.u32 %v2685, 7
      %v2687 = vsub.s32 %v2684, %v2686
      %v2688 = vrot.slane %v2679, %v2687
      %v2690 = vunpack.c.l.s4 1966171168
      %v2691 = vunpack.c.0.s8 %v2690
      %v2692 = vlaneseq
      %v2693 = vshrl.u32 %v2692, 7
      %v2694 = vsub.s32 %v2691, %v2693
      %v2695 = vrot.slane %v2680, %v2694
      %v2697 = vunpack.c.l.s4 1966171168
      %v2698 = vunpack.c.0.s8 %v2697
      %v2699 = vlaneseq
      %v2700 = vshrl.u32 %v2699, 7
      %v2701 = vsub.s32 %v2698, %v2700
      %v2702 = vrot.slane %v2681, %v2701
      %v2703 = vcombine.low %v2688, %v2695
      %v2705 = vunpack.c.l.s4 1966171168
      %v2706 = vunpack.c.0.s8 %v2705
      %v2707 = vlaneseq
      %v2708 = vshrl.u32 %v2707, 7
      %v2709 = vsub.s32 %v2706, %v2708
      %v2710 = vrot.slane %v2703, %v2709
      %v2712 = vunpack.c.l.s4 1966171168
      %v2713 = vunpack.c.0.s8 %v2712
      %v2714 = vlaneseq
      %v2715 = vshrl.u32 %v2714, 7
      %v2716 = vsub.s32 %v2713, %v2715
      %v2717 = vrot.slane %v2702, %v2716
      %v2718 = vcombine.low %v2710, %v2717
      %v2720 = vpack.i.b16 %v1987, %v1987
      %v2721 = vpack.i.b16 %v1989, %v1988
      %v2722 = vpack.i.b16 %v1991, %v1990
      %v2723 = vpack.i.b16 %v1993, %v1992
      %v2724 = vpack.i.b16 %v1995, %v1994
      %v2725 = vpack.i.b16 %v1997, %v1996
      %v2726 = vpack.i.b16 %v1999, %v1998
      %v2727 = vpack.i.b16 %v2001, %v2000
      %v2728 = vpack.i.b16 %v2003, %v2002
      %v2729 = vpack.i.b16 %v2005, %v2004
      %v2730 = vpack.i.b16 %v2007, %v2006
      %v2731 = vpack.i.b16 %v2009, %v2008
      %v2732 = vpack.i.b16 %v2011, %v2010
      %v2733 = vcombine.low %v2720, %v2720
      %v2734 = vcombine.low %v2721, %v2722
      %v2736 = vunpack.c.l.s4 1966171168
      %v2737 = vunpack.c.0.s8 %v2736
      %v2738 = vlaneseq
      %v2739 = vshrl.u32 %v2738, 7
      %v2740 = vsub.s32 %v2737, %v2739
      %v2741 = vrot.slane %v2733, %v2740
      %v2743 = vunpack.c.l.s4 1966171168
      %v2744 = vunpack.c.0.s8 %v2743
      %v2745 = vlaneseq
      %v2746 = vshrl.u32 %v2745, 7
      %v2747 = vsub.s32 %v2744, %v2746
      %v2748 = vrot.slane %v2734, %v2747
      %v2749 = vcombine.low %v2741, %v2748
      %v2751 = vunpack.c.l.s4 1966171168
      %v2752 = vunpack.c.0.s8 %v2751
      %v2753 = vlaneseq
      %v2754 = vshrl.u32 %v2753, 7
      %v2755 = vsub.s32 %v2752, %v2754
      %v2756 = vrot.slane %v2749, %v2755
      %v2757 = vcombine.low %v2756, %v2756
      %v2758 = vcombine.low %v2723, %v2724
      %v2759 = vcombine.low %v2725, %v2726
      %v2760 = vcombine.low %v2727, %v2728
      %v2761 = vcombine.low %v2729, %v2730
      %v2763 = vunpack.c.l.s4 1966171168
      %v2764 = vunpack.c.0.s8 %v2763
      %v2765 = vlaneseq
      %v2766 = vshrl.u32 %v2765, 7
      %v2767 = vsub.s32 %v2764, %v2766
      %v2768 = vrot.slane %v2758, %v2767
      %v2770 = vunpack.c.l.s4 1966171168
      %v2771 = vunpack.c.0.s8 %v2770
      %v2772 = vlaneseq
      %v2773 = vshrl.u32 %v2772, 7
      %v2774 = vsub.s32 %v2771, %v2773
      %v2775 = vrot.slane %v2759, %v2774
      %v2777 = vunpack.c.l.s4 1966171168
      %v2778 = vunpack.c.0.s8 %v2777
      %v2779 = vlaneseq
      %v2780 = vshrl.u32 %v2779, 7
      %v2781 = vsub.s32 %v2778, %v2780
      %v2782 = vrot.slane %v2760, %v2781
      %v2784 = vunpack.c.l.s4 1966171168
      %v2785 = vunpack.c.0.s8 %v2784
      %v2786 = vlaneseq
      %v2787 = vshrl.u32 %v2786, 7
      %v2788 = vsub.s32 %v2785, %v2787
      %v2789 = vrot.slane %v2761, %v2788
      %v2790 = vcombine.low %v2768, %v2775
      %v2791 = vcombine.low %v2782, %v2789
      %v2793 = vunpack.c.l.s4 1966171168
      %v2794 = vunpack.c.0.s8 %v2793
      %v2795 = vlaneseq
      %v2796 = vshrl.u32 %v2795, 7
      %v2797 = vsub.s32 %v2794, %v2796
      %v2798 = vrot.slane %v2790, %v2797
      %v2800 = vunpack.c.l.s4 1966171168
      %v2801 = vunpack.c.0.s8 %v2800
      %v2802 = vlaneseq
      %v2803 = vshrl.u32 %v2802, 7
      %v2804 = vsub.s32 %v2801, %v2803
      %v2805 = vrot.slane %v2791, %v2804
      %v2806 = vcombine.low %v2798, %v2805
      %v2807 = vcombine.low %v2731, %v2732
      %v2809 = vunpack.c.l.s4 1966171168
      %v2810 = vunpack.c.0.s8 %v2809
      %v2811 = vlaneseq
      %v2812 = vshrl.u32 %v2811, 7
      %v2813 = vsub.s32 %v2810, %v2812
      %v2814 = vrot.slane %v2807, %v2813
      %v2816 = vunpack.c.l.s4 1966171168
      %v2817 = vunpack.c.0.s8 %v2816
      %v2818 = vlaneseq
      %v2819 = vshrl.u32 %v2818, 7
      %v2820 = vsub.s32 %v2817, %v2819
      %v2821 = vrot.slane %v2814, %v2820
      %v2823 = vpack.i.b16 %v2389, %v2388
      %v2824 = vpack.i.b16 %v2391, %v2390
      %v2825 = vpack.i.b16 %v2393, %v2392
      %v2826 = vpack.i.b16 %v2395, %v2394
      %v2827 = vpack.i.b16 %v2397, %v2396
      %v2828 = vpack.i.b16 %v2399, %v2398
      %v2829 = vpack.i.b16 %v2401, %v2400
      %v2830 = vpack.i.b16 %v2403, %v2402
      %v2831 = vpack.i.b16 %v2405, %v2404
      %v2832 = vpack.i.b16 %v2407, %v2406
      %v2833 = vpack.i.b16 %v2409, %v2408
      %v2834 = vpack.i.b16 %v2411, %v2410
      %v2836 = vcombine.low %v2823, %v2824
      %v2837 = vcombine.low %v2825, %v2826
      %v2838 = vcombine.low %v2827, %v2828
      %v2840 = vunpack.c.l.s4 1966171168
      %v2841 = vunpack.c.0.s8 %v2840
      %v2842 = vlaneseq
      %v2843 = vshrl.u32 %v2842, 7
      %v2844 = vsub.s32 %v2841, %v2843
      %v2845 = vrot.slane %v2836, %v2844
      %v2847 = vunpack.c.l.s4 1966171168
      %v2848 = vunpack.c.0.s8 %v2847
      %v2849 = vlaneseq
      %v2850 = vshrl.u32 %v2849, 7
      %v2851 = vsub.s32 %v2848, %v2850
      %v2852 = vrot.slane %v2837, %v2851
      %v2854 = vunpack.c.l.s4 1966171168
      %v2855 = vunpack.c.0.s8 %v2854
      %v2856 = vlaneseq
      %v2857 = vshrl.u32 %v2856, 7
      %v2858 = vsub.s32 %v2855, %v2857
      %v2859 = vrot.slane %v2838, %v2858
      %v2860 = vcombine.low %v2845, %v2845
      %v2861 = vcombine.low %v2852, %v2859
      %v2863 = vunpack.c.l.s4 1966171168
      %v2864 = vunpack.c.0.s8 %v2863
      %v2865 = vlaneseq
      %v2866 = vshrl.u32 %v2865, 7
      %v2867 = vsub.s32 %v2864, %v2866
      %v2868 = vrot.slane %v2860, %v2867
      %v2870 = vunpack.c.l.s4 1966171168
      %v2871 = vunpack.c.0.s8 %v2870
      %v2872 = vlaneseq
      %v2873 = vshrl.u32 %v2872, 7
      %v2874 = vsub.s32 %v2871, %v2873
      %v2875 = vrot.slane %v2861, %v2874
      %v2876 = vcombine.low %v2868, %v2875
      %v2877 = vcombine.low %v2829, %v2830
      %v2878 = vcombine.low %v2831, %v2832
      %v2879 = vcombine.low %v2833, %v2834
      %v2881 = vunpack.c.l.s4 1966171168
      %v2882 = vunpack.c.0.s8 %v2881
      %v2883 = vlaneseq
      %v2884 = vshrl.u32 %v2883, 7
      %v2885 = vsub.s32 %v2882, %v2884
      %v2886 = vrot.slane %v2877, %v2885
      %v2888 = vunpack.c.l.s4 1966171168
      %v2889 = vunpack.c.0.s8 %v2888
      %v2890 = vlaneseq
      %v2891 = vshrl.u32 %v2890, 7
      %v2892 = vsub.s32 %v2889, %v2891
      %v2893 = vrot.slane %v2878, %v2892
      %v2895 = vunpack.c.l.s4 1966171168
      %v2896 = vunpack.c.0.s8 %v2895
      %v2897 = vlaneseq
      %v2898 = vshrl.u32 %v2897, 7
      %v2899 = vsub.s32 %v2896, %v2898
      %v2900 = vrot.slane %v2879, %v2899
      %v2902 = vunpack.c.l.s4 1966171168
      %v2903 = vunpack.c.0.s8 %v2902
      %v2904 = vlaneseq
      %v2905 = vshrl.u32 %v2904, 7
      %v2906 = vsub.s32 %v2903, %v2905
      %v2907 = vrot.slane %v2412, %v2906
      %v2908 = vcombine.low %v2886, %v2893
      %v2909 = vcombine.low %v2900, %v2907
      %v2911 = vunpack.c.l.s4 1966171168
      %v2912 = vunpack.c.0.s8 %v2911
      %v2913 = vlaneseq
      %v2914 = vshrl.u32 %v2913, 7
      %v2915 = vsub.s32 %v2912, %v2914
      %v2916 = vrot.slane %v2908, %v2915
      %v2918 = vunpack.c.l.s4 1966171168
      %v2919 = vunpack.c.0.s8 %v2918
      %v2920 = vlaneseq
      %v2921 = vshrl.u32 %v2920, 7
      %v2922 = vsub.s32 %v2919, %v2921
      %v2923 = vrot.slane %v2909, %v2922
      %v2924 = vcombine.low %v2916, %v2923
      %vm2925 = vcmask 1044480
      %vm2926 = vsmask.f32 4352
      %vm2927 = vmand %vm2925, %vm2926
      %v2928 = vsel %vm2927, %v2513, %v2552
      %vm2929 = vcmask 1040384
      %v2932 = vsel %vm2929, %v2615, %v2678
      %vm2933 = vcmask 1045504
      %vm2934 = vsmask.f32 5376
      %vm2935 = vmand %vm2933, %vm2934
      %v2936 = vsel %vm2935, %v2718, %v2757
      %vm2937 = vcmask 1041408
      %v2940 = vsel %vm2937, %v2821, %v2876
      %v2941 = vld [vmem:[%s2] sm:$0xf]
      %v2942 = vld [vmem:[%s2 + $0x4] sm:$0xf]
      %v2943 = vld [vmem:[%s2 + $0x8] sm:$0xf]
      %v2944 = vld [vmem:[%s2 + $0xc] sm:$0xf]
      %v2945 = vld [vmem:[%s2 + $0x10] sm:$0xf]
      %v2946 = vld [vmem:[%s2 + $0x14] sm:$0xf]
      %v2947 = vld [vmem:[%s2 + $0x18] sm:$0xf]
      %v2948 = vld [vmem:[%s2 + $0x1c] sm:$0xf]
      %v2957 = vunpack.c.l.b16 %v2941
      %v2958 = vunpack.c.l.b16 %v2942
      %v2959 = vunpack.c.l.b16 %v2943
      %v2960 = vunpack.c.l.b16 %v2944
      %v2961 = vunpack.c.l.b16 %v2945
      %v2962 = vunpack.c.l.b16 %v2946
      %v2963 = vunpack.c.l.b16 %v2947
      %v2964 = vunpack.c.l.b16 %v2948
      %v2965 = vpack.c.b16 %v2958, %v2957
      %v2966 = vpack.c.b16 %v2960, %v2959
      %v2967 = vpack.c.b16 %v2962, %v2961
      %v2968 = vpack.c.b16 %v2964, %v2963
      %vm2973 = vcmask 523264
      %v2975 = vsel %vm2973, %v2474, 0
      %v2978 = vsel %vm2973, %v2928, 0
      %v2981 = vsel %vm2973, %v2601, 0
      %v2983 = vsel %vm2973, %v2932, 0
      %v2986 = vsel %vm2973, %v2936, 0
      %v2989 = vsel %vm2973, %v2806, 0
      %v2991 = vsel %vm2973, %v2940, 0
      %v2994 = vsel %vm2973, %v2924, 0
      %2996 = vmatprep.subr.bf16.mxu0 0
      %2997 = vmatpush1.bf16.msra.mxu0 0
      %2998 = vmatprep.subr.bf16.mxu0 0
      %2999 = vmatpush1.bf16.msra.mxu0 0
      %3000 = vmatprep.subr.bf16.mxu0 0
      %3001 = vmatpush1.bf16.msra.mxu0 0
      %3002 = vmatprep.subr.bf16.mxu0 0
      %3003 = vmatpush1.bf16.msra.mxu0 0
      %3004 = vmatprep.subr.bf16.mxu0 0
      %3005 = vmatpush1.bf16.msra.mxu0 %v2968
      %3006 = vmatprep.subr.bf16.mxu0 0
      %3007 = vmatpush1.bf16.msra.mxu0 %v2967
      %3008 = vmatprep.subr.bf16.mxu0 0
      %3009 = vmatpush1.bf16.msra.mxu0 %v2966
      %3010 = vmatprep.subr.bf16.mxu0 0
      %3011 = vmatpush1.bf16.msra.mxu0 %v2965
      %3012 = vmatprep.subr.bf16.mxu0 0
      %3013 = vmatpush2.bf16.msra.mxu0 0
      %3014 = vmatprep.subr.bf16.mxu0 0
      %3015 = vmatpush2.bf16.msra.mxu0 0
      %3016 = vmatprep.subr.bf16.mxu0 0
      %3017 = vmatpush2.bf16.msra.mxu0 0
      %3018 = vmatprep.subr.bf16.mxu0 0
      %3019 = vmatpush2.bf16.msra.mxu0 0
      %3020 = vmatprep.subr.bf16.mxu0 0
      %3021 = vmatpush2.bf16.msra.mxu0 0
      %3022 = vmatprep.subr.bf16.mxu0 0
      %3023 = vmatpush2.bf16.msra.mxu0 0
      %3024 = vmatprep.subr.bf16.mxu0 0
      %3025 = vmatpush2.bf16.msra.mxu0 0
      %3026 = vmatprep.subr.bf16.mxu0 0
      %3027 = vmatpush2.bf16.msra.mxu0 0
      %3028 = vmatprep.mubr.bf16.mxu0 0
      %3029 = vmatmul.mubr.bf16.gmra.mxu0 %v2975
      %v3030 = vpop.f32.mrf.mxu0
      %v3031 = vadd.f32 0.0, %v3030
      %v3032 = vpop.f32.mrf.mxu0
      %v3033 = vpop.f32.mrf.mxu0
      %v3034 = vadd.f32 0.0, %v3033
      %v3035 = vpop.f32.mrf.mxu0
      %3036 = vmatprep.mubr.bf16.mxu0 0
      %3037 = vmatmul.mubr.bf16.gmra.mxu0 %v2978
      %v3038 = vpop.f32.mrf.mxu0
      %v3039 = vadd.f32 0.0, %v3038
      %v3040 = vpop.f32.mrf.mxu0
      %v3041 = vpop.f32.mrf.mxu0
      %v3042 = vadd.f32 0.0, %v3041
      %v3043 = vpop.f32.mrf.mxu0
      %3044 = vmatprep.mubr.bf16.mxu0 0
      %3045 = vmatmul.mubr.bf16.gmra.mxu0 %v2981
      %v3046 = vpop.f32.mrf.mxu0
      %v3047 = vadd.f32 0.0, %v3046
      %v3048 = vpop.f32.mrf.mxu0
      %v3049 = vpop.f32.mrf.mxu0
      %v3050 = vadd.f32 0.0, %v3049
      %v3051 = vpop.f32.mrf.mxu0
      %3052 = vmatprep.mubr.bf16.mxu0 0
      %3053 = vmatmul.mubr.bf16.gmra.mxu0 %v2983
      %v3054 = vpop.f32.mrf.mxu0
      %v3055 = vadd.f32 0.0, %v3054
      %v3056 = vpop.f32.mrf.mxu0
      %v3057 = vpop.f32.mrf.mxu0
      %v3058 = vadd.f32 0.0, %v3057
      %v3059 = vpop.f32.mrf.mxu0
      %3060 = vmatprep.mubr.bf16.mxu0 0
      %3061 = vmatmul.mubr.bf16.gmra.mxu0 %v2986
      %v3062 = vpop.f32.mrf.mxu0
      %v3063 = vadd.f32 0.0, %v3062
      %v3064 = vpop.f32.mrf.mxu0
      %v3065 = vpop.f32.mrf.mxu0
      %v3066 = vadd.f32 0.0, %v3065
      %v3067 = vpop.f32.mrf.mxu0
      %3068 = vmatprep.mubr.bf16.mxu0 0
      %3069 = vmatmul.mubr.bf16.gmra.mxu0 %v2989
      %v3070 = vpop.f32.mrf.mxu0
      %v3071 = vadd.f32 0.0, %v3070
      %v3072 = vpop.f32.mrf.mxu0
      %v3073 = vpop.f32.mrf.mxu0
      %v3074 = vadd.f32 0.0, %v3073
      %v3075 = vpop.f32.mrf.mxu0
      %3076 = vmatprep.mubr.bf16.mxu0 0
      %3077 = vmatmul.mubr.bf16.gmra.mxu0 %v2991
      %v3078 = vpop.f32.mrf.mxu0
      %v3079 = vadd.f32 0.0, %v3078
      %v3080 = vpop.f32.mrf.mxu0
      %v3081 = vpop.f32.mrf.mxu0
      %v3082 = vadd.f32 0.0, %v3081
      %v3083 = vpop.f32.mrf.mxu0
      %3084 = vmatprep.mubr.bf16.mxu0 0
      %3085 = vmatmul.mubr.bf16.gmra.mxu0 %v2994
      %v3086 = vpop.f32.mrf.mxu0
      %v3087 = vadd.f32 0.0, %v3086
      %v3088 = vpop.f32.mrf.mxu0
      %v3089 = vpop.f32.mrf.mxu0
      %v3090 = vadd.f32 0.0, %v3089
      %v3091 = vpop.f32.mrf.mxu0
      %3092 = vdwg.mxu0
      %v3093 = vpack.c.bf16 %v3034, %v3031
      %v3094 = vpack.c.bf16 %v3042, %v3039
      %v3095 = vpack.c.bf16 %v3050, %v3047
      %v3096 = vpack.c.bf16 %v3058, %v3055
      %v3097 = vpack.c.bf16 %v3066, %v3063
      %v3098 = vpack.c.bf16 %v3074, %v3071
      %v3099 = vpack.c.bf16 %v3082, %v3079
      %v3100 = vpack.c.bf16 %v3090, %v3087
      %v3109 = vunpack.c.l.b16 %v3093
      %v3110 = vunpack.c.h.b16 %v3093
      %v3111 = vunpack.c.l.b16 %v3094
      %v3112 = vunpack.c.h.b16 %v3094
      %v3113 = vunpack.c.l.b16 %v3095
      %v3114 = vunpack.c.h.b16 %v3095
      %v3115 = vunpack.c.l.b16 %v3096
      %v3116 = vunpack.c.h.b16 %v3096
      %v3117 = vunpack.c.l.b16 %v3097
      %v3118 = vunpack.c.h.b16 %v3097
      %v3119 = vunpack.c.l.b16 %v3098
      %v3120 = vunpack.c.h.b16 %v3098
      %v3121 = vunpack.c.l.b16 %v3099
      %v3122 = vunpack.c.h.b16 %v3099
      %v3123 = vunpack.c.l.b16 %v3100
      %v3124 = vunpack.c.h.b16 %v3100
      %v3125 = vpack.c.b16 %v3109, %v3109
      %v3126 = vpack.c.b16 %v3110, %v3110
      %v3127 = vpack.c.b16 %v3111, %v3111
      %v3128 = vpack.c.b16 %v3112, %v3112
      %v3129 = vpack.c.b16 %v3113, %v3113
      %v3130 = vpack.c.b16 %v3114, %v3114
      %v3131 = vpack.c.b16 %v3115, %v3115
      %v3132 = vpack.c.b16 %v3116, %v3116
      %v3133 = vpack.c.b16 %v3117, %v3117
      %v3134 = vpack.c.b16 %v3118, %v3118
      %v3135 = vpack.c.b16 %v3119, %v3119
      %v3136 = vpack.c.b16 %v3120, %v3120
      %v3137 = vpack.c.b16 %v3121, %v3121
      %v3138 = vpack.c.b16 %v3122, %v3122
      %v3139 = vpack.c.b16 %v3123, %v3123
      %v3140 = vpack.c.b16 %v3124, %v3124
      %3157 = vst [vmem:[%s284] sm:$0xf] %v3125
      %3158 = vst [vmem:[%s284 + $0x4] sm:$0xf] %v3126
      %3159 = vst [vmem:[%s284 + $0x8] sm:$0xf] %v3127
      %3160 = vst [vmem:[%s284 + $0xc] sm:$0xf] %v3128
      %3161 = vst [vmem:[%s284 + $0x10] sm:$0xf] %v3129
      %3162 = vst [vmem:[%s284 + $0x14] sm:$0xf] %v3130
      %3163 = vst [vmem:[%s284 + $0x18] sm:$0xf] %v3131
      %3164 = vst [vmem:[%s284 + $0x1c] sm:$0xf] %v3132
      %3165 = vst [vmem:[%s284 + $0x20] sm:$0xf] %v3133
      %3166 = vst [vmem:[%s284 + $0x24] sm:$0xf] %v3134
      %3167 = vst [vmem:[%s284 + $0x28] sm:$0xf] %v3135
      %3168 = vst [vmem:[%s284 + $0x2c] sm:$0xf] %v3136
      %3169 = vst [vmem:[%s284 + $0x30] sm:$0xf] %v3137
      %3170 = vst [vmem:[%s284 + $0x34] sm:$0xf] %v3138
      %3171 = vst [vmem:[%s284 + $0x38] sm:$0xf] %v3139
      %vm3172 = vcmask 1042432
      %vm3173 = vsmask.f32 2304
      %vm3174 = vmand %vm3172, %vm3173
      %v3175 = vld [vmem:[%s284 + $0x3c] sm:$0x7]
      %v3176 = vsel %vm3174, %v3140, %v3175
      %3177 = vst [vmem:[%s284 + $0x3c] sm:$0x7] %v3176
      %p3178 = scmp.lt.s32.totalorder %s18, 1
      %s3179 = scalar_select %p3178, %s18, 1
      %p3180 = scmp.lt.s32.totalorder %s19, 0
      %s3181 = scalar_select %p3180, %s19, 0
      %s3182 = smul.addr %s3181, 16
      %s3183 = smul.addr %s3179, 16
      %s3184 = sadd.s32 %s3182, %s3183
      %s3185 = smul.addr %s3184, 4
      %s3186 = scalar_lea.vmem %s3, %s3185
      // Predicated region
      $region33: #{upsample_forward.1} parent=31 // pred_check
        %p3187 = pneg %p127
      $region34: #{upsample_forward.1} parent=31 // pred_check_branch
        %3189 = sbr.rel (%p3187) target = $region36
      $region35: #{upsample_forward.1} parent=31 // pred_region
        _
      $region36: #{upsample_forward.1} parent=31 // pred_fallthru
        _
    $region32: #{upsample_forward.1} parent=5 // pred_fallthru
      _
    %p3190 = scmp.le.s32.totalorder 2, %s9
    // Predicated region
    $region37: #{upsample_forward.1} parent=5 // pred_check
      %p3191 = pneg %p3190
    $region38: #{upsample_forward.1} parent=5 // pred_check_branch
      %3193 = sbr.rel (%p3191) target = $region40
    $region39: #{upsample_forward.1} parent=5 // pred_region
      %s3194 = ssub.s32 %s9, 2
      // Predicated region
      $region41: #{upsample_forward.1} parent=39 // pred_check
        %p3195 = pneg %p133
      $region42: #{upsample_forward.1} parent=39 // pred_check_branch
        %3197 = sbr.rel (%p3195) target = $region44
      $region43: #{upsample_forward.1} parent=39 // pred_region
        %p3198 = scmp.lt.s32.totalorder %s20, 1
        %s3199 = scalar_select %p3198, %s20, 1
        %p3200 = scmp.lt.s32.totalorder %s21, 0
        %s3201 = scalar_select %p3200, %s21, 0
        %s3202 = smul.addr %s3201, 16
        %s3203 = smul.addr %s3199, 16
        %s3204 = sadd.s32 %s3202, %s3203
        %s3205 = smul.addr %s3204, 4
        %s3206 = scalar_lea.vmem %s3, %s3205
      $region44: #{upsample_forward.1} parent=39 // pred_fallthru
        _
    $region40: #{upsample_forward.1} parent=5 // pred_fallthru
      _
  $region6: #{upsample_forward.1} parent=0 // loop_footer
    %s13 = sadd.s32 1, %s9
  $region7: #{upsample_forward.1} parent=0 // loop_footer_branch
    %8 = sbr.rel target = $region3
  $region8: #{upsample_forward.1} parent=0 // loop_exit
    _

</llo_original>
